<compile_context>
chip_gen: v6e
topology: v6e:2x2x1
jax: 0.10.0
libtpu: 0.0.40
codegen_flags: <defaults>
</compile_context>

<pallas_src>
import functools
import math

import jax
import jax.numpy as jnp
from jax.experimental import pallas as pl

# ----------------------------- model config (small) -----------------------------
VOCAB = 64
VOCAB_PAD = 128          # lane-dense output width
HIDDEN = 32
HEADS = 2
HEAD_DIM = HIDDEN // HEADS
LAYERS = 2
FFN = 64
SEQ = 8
BATCH = 2
LN_EPS = 1e-6


# ------------------------------ in-kernel helpers --------------------------------
def _layernorm(x, g, b):
    mu = jnp.mean(x, axis=-1, keepdims=True)
    var = jnp.mean(jnp.square(x - mu), axis=-1, keepdims=True)
    return (x - mu) * jax.lax.rsqrt(var + LN_EPS) * g + b


def _gelu(x):
    # tanh-approximate GELU: one EUP tanh + a few VALU ops (kernel is VPU/overhead
    # bound at these shapes, so the old 12-op erf polynomial sat on the critical path).
    c = math.sqrt(2.0 / math.pi)
    return 0.5 * x * (1.0 + jnp.tanh(c * (x + 0.044715 * x * x * x)))


# ------------------------------ fused forward kernel ------------------------------
def _cloze_kernel(emb_ref, mask_ref, hv_ref, hm_ref,
                  wqkv_ref, wo_ref, w1_ref, w2_ref, lv_ref,
                  prob_ref, *, batch, seq):
    hidden = HIDDEN
    scale = 1.0 / math.sqrt(float(HEAD_DIM))

    hv = hv_ref[...]                                   # (8, 128) head/emb vectors
    eg = hv[0:1, :hidden]
    eb = hv[1:2, :hidden]

    # --- embedding layernorm (dropout is an eval no-op)
    h = _layernorm(emb_ref[...], eg, eb)               # (B*S, H) f32

    mask3 = mask_ref[...]                              # (B, 1, S) additive key mask

    # --- transformer encoder: layer loop statically unrolled in-kernel
    for l in range(LAYERS):
        lv = lv_ref[l]                                 # (8, 128) per-layer vectors
        bqkv = lv[0:1, :3 * hidden]
        bo = lv[1:2, :hidden]
        ln1g = lv[2:3, :hidden]
        ln1b = lv[3:4, :hidden]
        b1 = lv[4:5, :FFN]
        b2 = lv[5:6, :hidden]
        ln2g = lv[6:7, :hidden]
        ln2b = lv[7:8, :hidden]

        # fused Q/K/V projection: one bf16 MXU pass with N = 3*H, f32 accumulation
        qkv = jnp.dot(h.astype(jnp.bfloat16), wqkv_ref[l],
                      preferred_element_type=jnp.float32) + bqkv      # (B*S, 3H)

        q = qkv[:, :hidden].reshape(batch, seq, hidden)
        k = qkv[:, hidden:2 * hidden].reshape(batch, seq, hidden)
        v = qkv[:, 2 * hidden:].reshape(batch, seq, hidden)

        # per-head attention, batched over the batch axis (one 3-D dot_general
        # per matmul instead of one tiny matmul per (batch, head)).
        ctx_heads = []
        for hh in range(HEADS):
            c0 = hh * HEAD_DIM
            qh = q[:, :, c0:c0 + HEAD_DIM]             # (B, S, D)
            kh = k[:, :, c0:c0 + HEAD_DIM]
            vh = v[:, :, c0:c0 + HEAD_DIM]
            s = jnp.einsum('bqd,bkd->bqk', qh, kh,
                           preferred_element_type=jnp.float32) * scale + mask3
            s = s - jnp.max(s, axis=-1, keepdims=True)
            p = jnp.exp(s)
            p = p * pl.reciprocal(jnp.sum(p, axis=-1, keepdims=True), approx=True)
            ctx_heads.append(jnp.einsum('bqk,bkd->bqd', p, vh,
                                        preferred_element_type=jnp.float32))
        ctx = jnp.concatenate(ctx_heads, axis=-1).reshape(batch * seq, hidden)

        # output projection + residual + layernorm (post-norm BERT)
        attn = jnp.dot(ctx.astype(jnp.bfloat16), wo_ref[l],
                       preferred_element_type=jnp.float32) + bo
        inter = _layernorm(attn + h, ln1g, ln1b)

        # FFN: matmul -> bias+GELU -> matmul -> residual + LN
        ff = _gelu(jnp.dot(inter.astype(jnp.bfloat16), w1_ref[l],
                           preferred_element_type=jnp.float32) + b1)
        ff = jnp.dot(ff.astype(jnp.bfloat16), w2_ref[l],
                     preferred_element_type=jnp.float32) + b2
        h = _layernorm(ff + inter, ln2g, ln2b)

    # --- MLM head: linear -> gelu -> layernorm -> linear -> softmax over (padded) vocab
    m1w = hm_ref[0]                                    # (H, 128) bf16, zero padded
    m2w = hm_ref[1]                                    # (H, 128) bf16, zero padded
    m1b = hv[2:3, :hidden]
    mlng = hv[3:4, :hidden]
    mlnb = hv[4:5, :hidden]
    m2b = hv[5:6, :]                                   # (1, 128); pad lanes = -1e9

    x = jnp.dot(h.astype(jnp.bfloat16), m1w[:, :hidden],
                preferred_element_type=jnp.float32) + m1b
    x = _layernorm(_gelu(x), mlng, mlnb)
    x = jnp.dot(x.astype(jnp.bfloat16), m2w,
                preferred_element_type=jnp.float32) + m2b             # (B*S, 128)
    x = x - jnp.max(x, axis=-1, keepdims=True)
    e = jnp.exp(x)                                     # pad lanes underflow to 0
    # exact divide here so output probabilities sum to 1 within f32 rounding
    prob_ref[...] = e / jnp.sum(e, axis=-1, keepdims=True)            # only HBM store


# -------------------------------- model definition --------------------------------
def init_params(key):
    keys = iter(jax.random.split(key, 256))

    def nrm(shape):
        return jax.random.normal(next(keys), shape, jnp.float32) * 0.02

    def zeros(shape):
        return jnp.zeros(shape, jnp.float32)

    def ones(shape):
        return jnp.ones(shape, jnp.float32)

    params = {
        "word_emb": nrm((VOCAB, HIDDEN)),
        "pos_emb": nrm((SEQ, HIDDEN)),
        "seg_emb": nrm((3, HIDDEN)),
        "emb_ln_g": ones((HIDDEN,)),
        "emb_ln_b": zeros((HIDDEN,)),
        "layers": [],
        # MLM target head
        "mlm1_w": nrm((HIDDEN, HIDDEN)),
        "mlm1_b": zeros((HIDDEN,)),
        "mlm_ln_g": ones((HIDDEN,)),
        "mlm_ln_b": zeros((HIDDEN,)),
        "mlm2_w": nrm((HIDDEN, VOCAB)),
        "mlm2_b": zeros((VOCAB,)),
    }
    for _ in range(LAYERS):
        params["layers"].append({
            "wq": nrm((HIDDEN, HIDDEN)), "bq": zeros((HIDDEN,)),
            "wk": nrm((HIDDEN, HIDDEN)), "bk": zeros((HIDDEN,)),
            "wv": nrm((HIDDEN, HIDDEN)), "bv": zeros((HIDDEN,)),
            "wo": nrm((HIDDEN, HIDDEN)), "bo": zeros((HIDDEN,)),
            "ln1_g": ones((HIDDEN,)), "ln1_b": zeros((HIDDEN,)),
            "w1": nrm((HIDDEN, FFN)), "b1": zeros((FFN,)),
            "w2": nrm((FFN, HIDDEN)), "b2": zeros((HIDDEN,)),
            "ln2_g": ones((HIDDEN,)), "ln2_b": zeros((HIDDEN,)),
        })
    return params


def pack_params(params):
    """One-time packing of weights into the kernel's 9-operand layout.

    Runs ONCE at init (outside the jitted forward), so the per-call forward pass
    contains no stack/concat/pad ops.
    """
    L = params["layers"]

    def row(vec, fill=0.0):
        out = jnp.full((VOCAB_PAD,), fill, jnp.float32)
        return out.at[:vec.shape[0]].set(vec)

    wqkv = jnp.stack(
        [jnp.concatenate([p["wq"], p["wk"], p["wv"]], axis=1) for p in L]
    ).astype(jnp.bfloat16)                                           # (L, H, 3H)
    wo = jnp.stack([p["wo"] for p in L]).astype(jnp.bfloat16)        # (L, H, H)
    w1 = jnp.stack([p["w1"] for p in L]).astype(jnp.bfloat16)        # (L, H, FFN)
    w2 = jnp.stack([p["w2"] for p in L]).astype(jnp.bfloat16)        # (L, FFN, H)

    lvec = jnp.stack([
        jnp.stack([
            row(jnp.concatenate([p["bq"], p["bk"], p["bv"]])),
            row(p["bo"]),
            row(p["ln1_g"]),
            row(p["ln1_b"]),
            row(p["b1"]),
            row(p["b2"]),
            row(p["ln2_g"]),
            row(p["ln2_b"]),
        ]) for p in L
    ])                                                               # (L, 8, 128) f32

    hvec = jnp.stack([
        row(params["emb_ln_g"]),
        row(params["emb_ln_b"]),
        row(params["mlm1_b"]),
        row(params["mlm_ln_g"]),
        row(params["mlm_ln_b"]),
        row(params["mlm2_b"], fill=-1e9),     # pad vocab logits -> -1e9 (softmax-safe)
        jnp.zeros((VOCAB_PAD,), jnp.float32),
        jnp.zeros((VOCAB_PAD,), jnp.float32),
    ])                                                               # (8, 128) f32

    m1w_pad = jnp.zeros((HIDDEN, VOCAB_PAD), jnp.float32).at[:, :HIDDEN].set(
        params["mlm1_w"])
    m2w_pad = jnp.zeros((HIDDEN, VOCAB_PAD), jnp.float32).at[:, :VOCAB].set(
        params["mlm2_w"])
    hmat = jnp.stack([m1w_pad, m2w_pad]).astype(jnp.bfloat16)        # (2, H, 128)

    return {
        "word_emb": params["word_emb"],
        "pos_emb": params["pos_emb"],
        "seg_emb": params["seg_emb"],
        "wqkv": wqkv, "wo": wo, "w1": w1, "w2": w2,
        "lvec": lvec, "hvec": hvec, "hmat": hmat,
    }


@jax.jit
def cloze_forward(packed, src, seg):
    """src, seg: int32 (B, S). Returns prob (B, S, VOCAB), softmax over vocab."""
    b, s = src.shape

    # --- embedding gathers stay in plain JAX (single XLA gather per table)
    emb = (packed["word_emb"][src]
           + packed["pos_emb"][None, :s, :]
           + packed["seg_emb"][seg])
    emb2d = emb.reshape(b * s, HIDDEN)

    # --- additive key mask from seg (seg == 0 -> -10000), pre-shaped (B, 1, S)
    mask3d = jnp.where(seg > 0, 0.0, -10000.0).astype(jnp.float32)[:, None, :]

    kern = functools.partial(_cloze_kernel, batch=b, seq=s)
    # Single-step grid; whole working set (<0.5 MB) is VMEM-resident on v5e/v6e/v7x.
    # TODO(synk): if B*S grows to a few hundred rows, add a batch grid axis with
    # dimension_semantics=("parallel",) to use both v7x TensorCores.
    prob_pad = pl.pallas_call(
        kern,
        out_shape=jax.ShapeDtypeStruct((b * s, VOCAB_PAD), jnp.float32),
    )(emb2d, mask3d, packed["hvec"], packed["hmat"],
      packed["wqkv"], packed["wo"], packed["w1"], packed["w2"], packed["lvec"])

    return prob_pad[:, :VOCAB].reshape(b, s, VOCAB)


# ------------------------------------- main ----------------------------------------
if __name__ == "__main__":
    key = jax.random.PRNGKey(0)
    pkey, skey = jax.random.split(key)

    params = init_params(pkey)
    packed = pack_params(params)      # one-time packing, outside the jitted forward

    src = jax.random.randint(skey, (BATCH, SEQ), 0, VOCAB, dtype=jnp.int32)
    # segment ids: sentence A = 1, sentence B = 2, padding = 0 (masked in attention)
    seg = jnp.array([[1, 1, 1, 2, 2, 2, 0, 0],
                     [1, 1, 1, 1, 2, 2, 2, 0]], dtype=jnp.int32)

    prob = cloze_forward(packed, src, seg)
    prob = jax.block_until_ready(prob)

    assert prob.shape == (BATCH, SEQ, VOCAB), prob.shape
    assert bool(jnp.all(jnp.isfinite(prob)))
    assert bool(jnp.allclose(jnp.sum(prob, axis=-1), 1.0, atol=1e-4))
    print("KERNEL_OK")
</pallas_src>

<mosaic_0001>
module attributes {stable_mosaic.version = 11 : i64} {
  func.func @_cloze_kernel(%arg0: memref<16x32xf32, #tpu.memory_space<vmem>>, %arg1: memref<2x1x8xf32, #tpu.memory_space<vmem>>, %arg2: memref<8x128xf32, #tpu.memory_space<vmem>>, %arg3: memref<2x32x128xbf16, #tpu.memory_space<vmem>>, %arg4: memref<2x32x96xbf16, #tpu.memory_space<vmem>>, %arg5: memref<2x32x32xbf16, #tpu.memory_space<vmem>>, %arg6: memref<2x32x64xbf16, #tpu.memory_space<vmem>>, %arg7: memref<2x64x32xbf16, #tpu.memory_space<vmem>>, %arg8: memref<2x8x128xf32, #tpu.memory_space<vmem>>, %arg9: memref<16x128xf32, #tpu.memory_space<vmem>>) attributes {dimension_semantics = [], scalar_prefetch = 0 : i64, scratch_operands = 0 : i64, tpu.core_type = #tpu.core_type<tc>} {
    %c0 = arith.constant 0 : index
    %c0_0 = arith.constant 0 : index
    %0 = vector.load %arg2[%c0, %c0_0] : memref<8x128xf32, #tpu.memory_space<vmem>>, vector<8x128xf32>
    %1 = vector.extract_strided_slice %0 {offsets = [0, 0], sizes = [1, 32], strides = [1, 1]} : vector<8x128xf32> to vector<1x32xf32>
    %2 = vector.extract_strided_slice %0 {offsets = [1, 0], sizes = [1, 32], strides = [1, 1]} : vector<8x128xf32> to vector<1x32xf32>
    %c0_1 = arith.constant 0 : index
    %c0_2 = arith.constant 0 : index
    %3 = vector.load %arg0[%c0_1, %c0_2] : memref<16x32xf32, #tpu.memory_space<vmem>>, vector<16x32xf32>
    %cst = arith.constant dense<0.000000e+00> : vector<16xf32>
    %4 = vector.multi_reduction <add>, %3, %cst [1] : vector<16x32xf32> to vector<16xf32>
    %5 = vector.shape_cast %4 : vector<16xf32> to vector<16x1xf32>
    %cst_3 = arith.constant 3.200000e+01 : f32
    %6 = vector.broadcast %cst_3 : f32 to vector<16x1xf32>
    %7 = arith.divf %5, %6 : vector<16x1xf32>
    %8 = vector.broadcast %7 : vector<16x1xf32> to vector<16x32xf32>
    %9 = arith.subf %3, %8 : vector<16x32xf32>
    %10 = arith.mulf %9, %9 : vector<16x32xf32>
    %cst_4 = arith.constant dense<0.000000e+00> : vector<16xf32>
    %11 = vector.multi_reduction <add>, %10, %cst_4 [1] : vector<16x32xf32> to vector<16xf32>
    %12 = vector.shape_cast %11 : vector<16xf32> to vector<16x1xf32>
    %cst_5 = arith.constant 3.200000e+01 : f32
    %13 = vector.broadcast %cst_5 : f32 to vector<16x1xf32>
    %14 = arith.divf %12, %13 : vector<16x1xf32>
    %15 = vector.broadcast %7 : vector<16x1xf32> to vector<16x32xf32>
    %16 = arith.subf %3, %15 : vector<16x32xf32>
    %cst_6 = arith.constant 9.99999997E-7 : f32
    %17 = vector.broadcast %cst_6 : f32 to vector<16x1xf32>
    %18 = arith.addf %14, %17 : vector<16x1xf32>
    %19 = math.rsqrt %18 : vector<16x1xf32>
    %20 = vector.broadcast %19 : vector<16x1xf32> to vector<16x32xf32>
    %21 = arith.mulf %16, %20 : vector<16x32xf32>
    %22 = vector.broadcast %1 : vector<1x32xf32> to vector<16x32xf32>
    %23 = arith.mulf %21, %22 : vector<16x32xf32>
    %24 = vector.broadcast %2 : vector<1x32xf32> to vector<16x32xf32>
    %25 = arith.addf %23, %24 : vector<16x32xf32>
    %c0_7 = arith.constant 0 : index
    %c0_8 = arith.constant 0 : index
    %c0_9 = arith.constant 0 : index
    %26 = vector.load %arg1[%c0_7, %c0_8, %c0_9] : memref<2x1x8xf32, #tpu.memory_space<vmem>>, vector<2x1x8xf32>
    %c0_10 = arith.constant 0 : index
    %c0_11 = arith.constant 0 : index
    %c0_12 = arith.constant 0 : index
    %27 = vector.load %arg8[%c0_10, %c0_11, %c0_12] : memref<2x8x128xf32, #tpu.memory_space<vmem>>, vector<1x8x128xf32>
    %28 = vector.shape_cast %27 : vector<1x8x128xf32> to vector<8x128xf32>
    %29 = vector.extract_strided_slice %28 {offsets = [0, 0], sizes = [1, 96], strides = [1, 1]} : vector<8x128xf32> to vector<1x96xf32>
    %30 = vector.extract_strided_slice %28 {offsets = [1, 0], sizes = [1, 32], strides = [1, 1]} : vector<8x128xf32> to vector<1x32xf32>
    %31 = vector.extract_strided_slice %28 {offsets = [2, 0], sizes = [1, 32], strides = [1, 1]} : vector<8x128xf32> to vector<1x32xf32>
    %32 = vector.extract_strided_slice %28 {offsets = [3, 0], sizes = [1, 32], strides = [1, 1]} : vector<8x128xf32> to vector<1x32xf32>
    %33 = vector.extract_strided_slice %28 {offsets = [4, 0], sizes = [1, 64], strides = [1, 1]} : vector<8x128xf32> to vector<1x64xf32>
    %34 = vector.extract_strided_slice %28 {offsets = [5, 0], sizes = [1, 32], strides = [1, 1]} : vector<8x128xf32> to vector<1x32xf32>
    %35 = vector.extract_strided_slice %28 {offsets = [6, 0], sizes = [1, 32], strides = [1, 1]} : vector<8x128xf32> to vector<1x32xf32>
    %36 = vector.extract_strided_slice %28 {offsets = [7, 0], sizes = [1, 32], strides = [1, 1]} : vector<8x128xf32> to vector<1x32xf32>
    %37 = arith.truncf %25 : vector<16x32xf32> to vector<16x32xbf16>
    %c0_13 = arith.constant 0 : index
    %c0_14 = arith.constant 0 : index
    %c0_15 = arith.constant 0 : index
    %38 = vector.load %arg4[%c0_13, %c0_14, %c0_15] : memref<2x32x96xbf16, #tpu.memory_space<vmem>>, vector<1x32x96xbf16>
    %39 = vector.shape_cast %38 : vector<1x32x96xbf16> to vector<32x96xbf16>
    %cst_16 = arith.constant dense<0.000000e+00> : vector<16x96xf32>
    %40 = tpu.matmul %37, %39, %cst_16 {dimension_numbers = #tpu.dot_dimension_numbers<[1], [0], [0], [1], [0, 0, 1, 1], [], []>} : vector<16x32xbf16>, vector<32x96xbf16>, vector<16x96xf32> -> vector<16x96xf32>
    %41 = vector.broadcast %29 : vector<1x96xf32> to vector<16x96xf32>
    %42 = arith.addf %40, %41 : vector<16x96xf32>
    %43 = vector.extract_strided_slice %42 {offsets = [0, 0], sizes = [16, 32], strides = [1, 1]} : vector<16x96xf32> to vector<16x32xf32>
    %44 = vector.shape_cast %43 : vector<16x32xf32> to vector<2x8x32xf32>
    %45 = vector.extract_strided_slice %42 {offsets = [0, 32], sizes = [16, 32], strides = [1, 1]} : vector<16x96xf32> to vector<16x32xf32>
    %46 = vector.shape_cast %45 : vector<16x32xf32> to vector<2x8x32xf32>
    %47 = vector.extract_strided_slice %42 {offsets = [0, 64], sizes = [16, 32], strides = [1, 1]} : vector<16x96xf32> to vector<16x32xf32>
    %48 = vector.shape_cast %47 : vector<16x32xf32> to vector<2x8x32xf32>
    %49 = vector.extract_strided_slice %44 {offsets = [0, 0, 0], sizes = [2, 8, 16], strides = [1, 1, 1]} : vector<2x8x32xf32> to vector<2x8x16xf32>
    %50 = vector.extract_strided_slice %46 {offsets = [0, 0, 0], sizes = [2, 8, 16], strides = [1, 1, 1]} : vector<2x8x32xf32> to vector<2x8x16xf32>
    %51 = vector.extract_strided_slice %48 {offsets = [0, 0, 0], sizes = [2, 8, 16], strides = [1, 1, 1]} : vector<2x8x32xf32> to vector<2x8x16xf32>
    "tpu.trace_start"() <{level = 10 : i32, message = "bqd,bkd->bqk"}> : () -> ()
    %cst_17 = arith.constant dense<0.000000e+00> : vector<2x8x8xf32>
    %52 = tpu.matmul %49, %50, %cst_17 {dimension_numbers = #tpu.dot_dimension_numbers<[2], [2], [1], [1], [0, 0, 0, 1, 1, 1], [0], [0]>} : vector<2x8x16xf32>, vector<2x8x16xf32>, vector<2x8x8xf32> -> vector<2x8x8xf32>
    "tpu.trace_stop"() : () -> ()
    %cst_18 = arith.constant 2.500000e-01 : f32
    %53 = vector.broadcast %cst_18 : f32 to vector<2x8x8xf32>
    %54 = arith.mulf %52, %53 : vector<2x8x8xf32>
    %55 = vector.broadcast %26 : vector<2x1x8xf32> to vector<2x8x8xf32>
    %56 = arith.addf %54, %55 : vector<2x8x8xf32>
    %cst_19 = arith.constant dense<0xFF800000> : vector<2x8xf32>
    %57 = vector.multi_reduction <maximumf>, %56, %cst_19 [2] : vector<2x8x8xf32> to vector<2x8xf32>
    %58 = vector.shape_cast %57 : vector<2x8xf32> to vector<2x8x1xf32>
    %59 = vector.broadcast %58 : vector<2x8x1xf32> to vector<2x8x8xf32>
    %60 = arith.subf %56, %59 : vector<2x8x8xf32>
    %61 = math.exp %60 : vector<2x8x8xf32>
    %cst_20 = arith.constant dense<0.000000e+00> : vector<2x8xf32>
    %62 = vector.multi_reduction <add>, %61, %cst_20 [2] : vector<2x8x8xf32> to vector<2x8xf32>
    %63 = vector.shape_cast %62 : vector<2x8xf32> to vector<2x8x1xf32>
    %64 = tpu.reciprocal %63 {approx = true} : vector<2x8x1xf32> -> vector<2x8x1xf32>
    %65 = vector.broadcast %64 : vector<2x8x1xf32> to vector<2x8x8xf32>
    %66 = arith.mulf %61, %65 : vector<2x8x8xf32>
    "tpu.trace_start"() <{level = 10 : i32, message = "bqk,bkd->bqd"}> : () -> ()
    %cst_21 = arith.constant dense<0.000000e+00> : vector<2x8x16xf32>
    %67 = tpu.matmul %66, %51, %cst_21 {dimension_numbers = #tpu.dot_dimension_numbers<[2], [1], [1], [2], [0, 0, 0, 1, 1, 2], [0], [0]>} : vector<2x8x8xf32>, vector<2x8x16xf32>, vector<2x8x16xf32> -> vector<2x8x16xf32>
    "tpu.trace_stop"() : () -> ()
    %68 = vector.extract_strided_slice %44 {offsets = [0, 0, 16], sizes = [2, 8, 16], strides = [1, 1, 1]} : vector<2x8x32xf32> to vector<2x8x16xf32>
    %69 = vector.extract_strided_slice %46 {offsets = [0, 0, 16], sizes = [2, 8, 16], strides = [1, 1, 1]} : vector<2x8x32xf32> to vector<2x8x16xf32>
    %70 = vector.extract_strided_slice %48 {offsets = [0, 0, 16], sizes = [2, 8, 16], strides = [1, 1, 1]} : vector<2x8x32xf32> to vector<2x8x16xf32>
    "tpu.trace_start"() <{level = 10 : i32, message = "bqd,bkd->bqk"}> : () -> ()
    %cst_22 = arith.constant dense<0.000000e+00> : vector<2x8x8xf32>
    %71 = tpu.matmul %68, %69, %cst_22 {dimension_numbers = #tpu.dot_dimension_numbers<[2], [2], [1], [1], [0, 0, 0, 1, 1, 1], [0], [0]>} : vector<2x8x16xf32>, vector<2x8x16xf32>, vector<2x8x8xf32> -> vector<2x8x8xf32>
    "tpu.trace_stop"() : () -> ()
    %cst_23 = arith.constant 2.500000e-01 : f32
    %72 = vector.broadcast %cst_23 : f32 to vector<2x8x8xf32>
    %73 = arith.mulf %71, %72 : vector<2x8x8xf32>
    %74 = vector.broadcast %26 : vector<2x1x8xf32> to vector<2x8x8xf32>
    %75 = arith.addf %73, %74 : vector<2x8x8xf32>
    %cst_24 = arith.constant dense<0xFF800000> : vector<2x8xf32>
    %76 = vector.multi_reduction <maximumf>, %75, %cst_24 [2] : vector<2x8x8xf32> to vector<2x8xf32>
    %77 = vector.shape_cast %76 : vector<2x8xf32> to vector<2x8x1xf32>
    %78 = vector.broadcast %77 : vector<2x8x1xf32> to vector<2x8x8xf32>
    %79 = arith.subf %75, %78 : vector<2x8x8xf32>
    %80 = math.exp %79 : vector<2x8x8xf32>
    %cst_25 = arith.constant dense<0.000000e+00> : vector<2x8xf32>
    %81 = vector.multi_reduction <add>, %80, %cst_25 [2] : vector<2x8x8xf32> to vector<2x8xf32>
    %82 = vector.shape_cast %81 : vector<2x8xf32> to vector<2x8x1xf32>
    %83 = tpu.reciprocal %82 {approx = true} : vector<2x8x1xf32> -> vector<2x8x1xf32>
    %84 = vector.broadcast %83 : vector<2x8x1xf32> to vector<2x8x8xf32>
    %85 = arith.mulf %80, %84 : vector<2x8x8xf32>
    "tpu.trace_start"() <{level = 10 : i32, message = "bqk,bkd->bqd"}> : () -> ()
    %cst_26 = arith.constant dense<0.000000e+00> : vector<2x8x16xf32>
    %86 = tpu.matmul %85, %70, %cst_26 {dimension_numbers = #tpu.dot_dimension_numbers<[2], [1], [1], [2], [0, 0, 0, 1, 1, 2], [0], [0]>} : vector<2x8x8xf32>, vector<2x8x16xf32>, vector<2x8x16xf32> -> vector<2x8x16xf32>
    "tpu.trace_stop"() : () -> ()
    %87 = tpu.concatenate %67, %86 in 2 : vector<2x8x16xf32>, vector<2x8x16xf32> -> vector<2x8x32xf32>
    %88 = vector.shape_cast %87 : vector<2x8x32xf32> to vector<16x32xf32>
    %89 = arith.truncf %88 : vector<16x32xf32> to vector<16x32xbf16>
    %c0_27 = arith.constant 0 : index
    %c0_28 = arith.constant 0 : index
    %c0_29 = arith.constant 0 : index
    %90 = vector.load %arg5[%c0_27, %c0_28, %c0_29] : memref<2x32x32xbf16, #tpu.memory_space<vmem>>, vector<1x32x32xbf16>
    %91 = vector.shape_cast %90 : vector<1x32x32xbf16> to vector<32x32xbf16>
    %cst_30 = arith.constant dense<0.000000e+00> : vector<16x32xf32>
    %92 = tpu.matmul %89, %91, %cst_30 {dimension_numbers = #tpu.dot_dimension_numbers<[1], [0], [0], [1], [0, 0, 1, 1], [], []>} : vector<16x32xbf16>, vector<32x32xbf16>, vector<16x32xf32> -> vector<16x32xf32>
    %93 = vector.broadcast %30 : vector<1x32xf32> to vector<16x32xf32>
    %94 = arith.addf %92, %93 : vector<16x32xf32>
    %95 = arith.addf %94, %25 : vector<16x32xf32>
    %cst_31 = arith.constant dense<0.000000e+00> : vector<16xf32>
    %96 = vector.multi_reduction <add>, %95, %cst_31 [1] : vector<16x32xf32> to vector<16xf32>
    %97 = vector.shape_cast %96 : vector<16xf32> to vector<16x1xf32>
    %cst_32 = arith.constant 3.200000e+01 : f32
    %98 = vector.broadcast %cst_32 : f32 to vector<16x1xf32>
    %99 = arith.divf %97, %98 : vector<16x1xf32>
    %100 = vector.broadcast %99 : vector<16x1xf32> to vector<16x32xf32>
    %101 = arith.subf %95, %100 : vector<16x32xf32>
    %102 = arith.mulf %101, %101 : vector<16x32xf32>
    %cst_33 = arith.constant dense<0.000000e+00> : vector<16xf32>
    %103 = vector.multi_reduction <add>, %102, %cst_33 [1] : vector<16x32xf32> to vector<16xf32>
    %104 = vector.shape_cast %103 : vector<16xf32> to vector<16x1xf32>
    %cst_34 = arith.constant 3.200000e+01 : f32
    %105 = vector.broadcast %cst_34 : f32 to vector<16x1xf32>
    %106 = arith.divf %104, %105 : vector<16x1xf32>
    %107 = vector.broadcast %99 : vector<16x1xf32> to vector<16x32xf32>
    %108 = arith.subf %95, %107 : vector<16x32xf32>
    %cst_35 = arith.constant 9.99999997E-7 : f32
    %109 = vector.broadcast %cst_35 : f32 to vector<16x1xf32>
    %110 = arith.addf %106, %109 : vector<16x1xf32>
    %111 = math.rsqrt %110 : vector<16x1xf32>
    %112 = vector.broadcast %111 : vector<16x1xf32> to vector<16x32xf32>
    %113 = arith.mulf %108, %112 : vector<16x32xf32>
    %114 = vector.broadcast %31 : vector<1x32xf32> to vector<16x32xf32>
    %115 = arith.mulf %113, %114 : vector<16x32xf32>
    %116 = vector.broadcast %32 : vector<1x32xf32> to vector<16x32xf32>
    %117 = arith.addf %115, %116 : vector<16x32xf32>
    %118 = arith.truncf %117 : vector<16x32xf32> to vector<16x32xbf16>
    %c0_36 = arith.constant 0 : index
    %c0_37 = arith.constant 0 : index
    %c0_38 = arith.constant 0 : index
    %119 = vector.load %arg6[%c0_36, %c0_37, %c0_38] : memref<2x32x64xbf16, #tpu.memory_space<vmem>>, vector<1x32x64xbf16>
    %120 = vector.shape_cast %119 : vector<1x32x64xbf16> to vector<32x64xbf16>
    %cst_39 = arith.constant dense<0.000000e+00> : vector<16x64xf32>
    %121 = tpu.matmul %118, %120, %cst_39 {dimension_numbers = #tpu.dot_dimension_numbers<[1], [0], [0], [1], [0, 0, 1, 1], [], []>} : vector<16x32xbf16>, vector<32x64xbf16>, vector<16x64xf32> -> vector<16x64xf32>
    %122 = vector.broadcast %33 : vector<1x64xf32> to vector<16x64xf32>
    %123 = arith.addf %121, %122 : vector<16x64xf32>
    %cst_40 = arith.constant 5.000000e-01 : f32
    %124 = vector.broadcast %cst_40 : f32 to vector<16x64xf32>
    %125 = arith.mulf %124, %123 : vector<16x64xf32>
    %cst_41 = arith.constant 4.471500e-02 : f32
    %126 = vector.broadcast %cst_41 : f32 to vector<16x64xf32>
    %127 = arith.mulf %126, %123 : vector<16x64xf32>
    %128 = arith.mulf %127, %123 : vector<16x64xf32>
    %129 = arith.mulf %128, %123 : vector<16x64xf32>
    %130 = arith.addf %123, %129 : vector<16x64xf32>
    %cst_42 = arith.constant 0.797884583 : f32
    %131 = vector.broadcast %cst_42 : f32 to vector<16x64xf32>
    %132 = arith.mulf %131, %130 : vector<16x64xf32>
    %133 = math.tanh %132 : vector<16x64xf32>
    %cst_43 = arith.constant 1.000000e+00 : f32
    %134 = vector.broadcast %cst_43 : f32 to vector<16x64xf32>
    %135 = arith.addf %134, %133 : vector<16x64xf32>
    %136 = arith.mulf %125, %135 : vector<16x64xf32>
    %137 = arith.truncf %136 : vector<16x64xf32> to vector<16x64xbf16>
    %c0_44 = arith.constant 0 : index
    %c0_45 = arith.constant 0 : index
    %c0_46 = arith.constant 0 : index
    %138 = vector.load %arg7[%c0_44, %c0_45, %c0_46] : memref<2x64x32xbf16, #tpu.memory_space<vmem>>, vector<1x64x32xbf16>
    %139 = vector.shape_cast %138 : vector<1x64x32xbf16> to vector<64x32xbf16>
    %cst_47 = arith.constant dense<0.000000e+00> : vector<16x32xf32>
    %140 = tpu.matmul %137, %139, %cst_47 {dimension_numbers = #tpu.dot_dimension_numbers<[1], [0], [0], [1], [0, 0, 1, 1], [], []>} : vector<16x64xbf16>, vector<64x32xbf16>, vector<16x32xf32> -> vector<16x32xf32>
    %141 = vector.broadcast %34 : vector<1x32xf32> to vector<16x32xf32>
    %142 = arith.addf %140, %141 : vector<16x32xf32>
    %143 = arith.addf %142, %117 : vector<16x32xf32>
    %cst_48 = arith.constant dense<0.000000e+00> : vector<16xf32>
    %144 = vector.multi_reduction <add>, %143, %cst_48 [1] : vector<16x32xf32> to vector<16xf32>
    %145 = vector.shape_cast %144 : vector<16xf32> to vector<16x1xf32>
    %cst_49 = arith.constant 3.200000e+01 : f32
    %146 = vector.broadcast %cst_49 : f32 to vector<16x1xf32>
    %147 = arith.divf %145, %146 : vector<16x1xf32>
    %148 = vector.broadcast %147 : vector<16x1xf32> to vector<16x32xf32>
    %149 = arith.subf %143, %148 : vector<16x32xf32>
    %150 = arith.mulf %149, %149 : vector<16x32xf32>
    %cst_50 = arith.constant dense<0.000000e+00> : vector<16xf32>
    %151 = vector.multi_reduction <add>, %150, %cst_50 [1] : vector<16x32xf32> to vector<16xf32>
    %152 = vector.shape_cast %151 : vector<16xf32> to vector<16x1xf32>
    %cst_51 = arith.constant 3.200000e+01 : f32
    %153 = vector.broadcast %cst_51 : f32 to vector<16x1xf32>
    %154 = arith.divf %152, %153 : vector<16x1xf32>
    %155 = vector.broadcast %147 : vector<16x1xf32> to vector<16x32xf32>
    %156 = arith.subf %143, %155 : vector<16x32xf32>
    %cst_52 = arith.constant 9.99999997E-7 : f32
    %157 = vector.broadcast %cst_52 : f32 to vector<16x1xf32>
    %158 = arith.addf %154, %157 : vector<16x1xf32>
    %159 = math.rsqrt %158 : vector<16x1xf32>
    %160 = vector.broadcast %159 : vector<16x1xf32> to vector<16x32xf32>
    %161 = arith.mulf %156, %160 : vector<16x32xf32>
    %162 = vector.broadcast %35 : vector<1x32xf32> to vector<16x32xf32>
    %163 = arith.mulf %161, %162 : vector<16x32xf32>
    %164 = vector.broadcast %36 : vector<1x32xf32> to vector<16x32xf32>
    %165 = arith.addf %163, %164 : vector<16x32xf32>
    %c1 = arith.constant 1 : index
    %c0_53 = arith.constant 0 : index
    %c0_54 = arith.constant 0 : index
    %166 = vector.load %arg8[%c1, %c0_53, %c0_54] : memref<2x8x128xf32, #tpu.memory_space<vmem>>, vector<1x8x128xf32>
    %167 = vector.shape_cast %166 : vector<1x8x128xf32> to vector<8x128xf32>
    %168 = vector.extract_strided_slice %167 {offsets = [0, 0], sizes = [1, 96], strides = [1, 1]} : vector<8x128xf32> to vector<1x96xf32>
    %169 = vector.extract_strided_slice %167 {offsets = [1, 0], sizes = [1, 32], strides = [1, 1]} : vector<8x128xf32> to vector<1x32xf32>
    %170 = vector.extract_strided_slice %167 {offsets = [2, 0], sizes = [1, 32], strides = [1, 1]} : vector<8x128xf32> to vector<1x32xf32>
    %171 = vector.extract_strided_slice %167 {offsets = [3, 0], sizes = [1, 32], strides = [1, 1]} : vector<8x128xf32> to vector<1x32xf32>
    %172 = vector.extract_strided_slice %167 {offsets = [4, 0], sizes = [1, 64], strides = [1, 1]} : vector<8x128xf32> to vector<1x64xf32>
    %173 = vector.extract_strided_slice %167 {offsets = [5, 0], sizes = [1, 32], strides = [1, 1]} : vector<8x128xf32> to vector<1x32xf32>
    %174 = vector.extract_strided_slice %167 {offsets = [6, 0], sizes = [1, 32], strides = [1, 1]} : vector<8x128xf32> to vector<1x32xf32>
    %175 = vector.extract_strided_slice %167 {offsets = [7, 0], sizes = [1, 32], strides = [1, 1]} : vector<8x128xf32> to vector<1x32xf32>
    %176 = arith.truncf %165 : vector<16x32xf32> to vector<16x32xbf16>
    %c1_55 = arith.constant 1 : index
    %c0_56 = arith.constant 0 : index
    %c0_57 = arith.constant 0 : index
    %177 = vector.load %arg4[%c1_55, %c0_56, %c0_57] : memref<2x32x96xbf16, #tpu.memory_space<vmem>>, vector<1x32x96xbf16>
    %178 = vector.shape_cast %177 : vector<1x32x96xbf16> to vector<32x96xbf16>
    %cst_58 = arith.constant dense<0.000000e+00> : vector<16x96xf32>
    %179 = tpu.matmul %176, %178, %cst_58 {dimension_numbers = #tpu.dot_dimension_numbers<[1], [0], [0], [1], [0, 0, 1, 1], [], []>} : vector<16x32xbf16>, vector<32x96xbf16>, vector<16x96xf32> -> vector<16x96xf32>
    %180 = vector.broadcast %168 : vector<1x96xf32> to vector<16x96xf32>
    %181 = arith.addf %179, %180 : vector<16x96xf32>
    %182 = vector.extract_strided_slice %181 {offsets = [0, 0], sizes = [16, 32], strides = [1, 1]} : vector<16x96xf32> to vector<16x32xf32>
    %183 = vector.shape_cast %182 : vector<16x32xf32> to vector<2x8x32xf32>
    %184 = vector.extract_strided_slice %181 {offsets = [0, 32], sizes = [16, 32], strides = [1, 1]} : vector<16x96xf32> to vector<16x32xf32>
    %185 = vector.shape_cast %184 : vector<16x32xf32> to vector<2x8x32xf32>
    %186 = vector.extract_strided_slice %181 {offsets = [0, 64], sizes = [16, 32], strides = [1, 1]} : vector<16x96xf32> to vector<16x32xf32>
    %187 = vector.shape_cast %186 : vector<16x32xf32> to vector<2x8x32xf32>
    %188 = vector.extract_strided_slice %183 {offsets = [0, 0, 0], sizes = [2, 8, 16], strides = [1, 1, 1]} : vector<2x8x32xf32> to vector<2x8x16xf32>
    %189 = vector.extract_strided_slice %185 {offsets = [0, 0, 0], sizes = [2, 8, 16], strides = [1, 1, 1]} : vector<2x8x32xf32> to vector<2x8x16xf32>
    %190 = vector.extract_strided_slice %187 {offsets = [0, 0, 0], sizes = [2, 8, 16], strides = [1, 1, 1]} : vector<2x8x32xf32> to vector<2x8x16xf32>
    "tpu.trace_start"() <{level = 10 : i32, message = "bqd,bkd->bqk"}> : () -> ()
    %cst_59 = arith.constant dense<0.000000e+00> : vector<2x8x8xf32>
    %191 = tpu.matmul %188, %189, %cst_59 {dimension_numbers = #tpu.dot_dimension_numbers<[2], [2], [1], [1], [0, 0, 0, 1, 1, 1], [0], [0]>} : vector<2x8x16xf32>, vector<2x8x16xf32>, vector<2x8x8xf32> -> vector<2x8x8xf32>
    "tpu.trace_stop"() : () -> ()
    %cst_60 = arith.constant 2.500000e-01 : f32
    %192 = vector.broadcast %cst_60 : f32 to vector<2x8x8xf32>
    %193 = arith.mulf %191, %192 : vector<2x8x8xf32>
    %194 = vector.broadcast %26 : vector<2x1x8xf32> to vector<2x8x8xf32>
    %195 = arith.addf %193, %194 : vector<2x8x8xf32>
    %cst_61 = arith.constant dense<0xFF800000> : vector<2x8xf32>
    %196 = vector.multi_reduction <maximumf>, %195, %cst_61 [2] : vector<2x8x8xf32> to vector<2x8xf32>
    %197 = vector.shape_cast %196 : vector<2x8xf32> to vector<2x8x1xf32>
    %198 = vector.broadcast %197 : vector<2x8x1xf32> to vector<2x8x8xf32>
    %199 = arith.subf %195, %198 : vector<2x8x8xf32>
    %200 = math.exp %199 : vector<2x8x8xf32>
    %cst_62 = arith.constant dense<0.000000e+00> : vector<2x8xf32>
    %201 = vector.multi_reduction <add>, %200, %cst_62 [2] : vector<2x8x8xf32> to vector<2x8xf32>
    %202 = vector.shape_cast %201 : vector<2x8xf32> to vector<2x8x1xf32>
    %203 = tpu.reciprocal %202 {approx = true} : vector<2x8x1xf32> -> vector<2x8x1xf32>
    %204 = vector.broadcast %203 : vector<2x8x1xf32> to vector<2x8x8xf32>
    %205 = arith.mulf %200, %204 : vector<2x8x8xf32>
    "tpu.trace_start"() <{level = 10 : i32, message = "bqk,bkd->bqd"}> : () -> ()
    %cst_63 = arith.constant dense<0.000000e+00> : vector<2x8x16xf32>
    %206 = tpu.matmul %205, %190, %cst_63 {dimension_numbers = #tpu.dot_dimension_numbers<[2], [1], [1], [2], [0, 0, 0, 1, 1, 2], [0], [0]>} : vector<2x8x8xf32>, vector<2x8x16xf32>, vector<2x8x16xf32> -> vector<2x8x16xf32>
    "tpu.trace_stop"() : () -> ()
    %207 = vector.extract_strided_slice %183 {offsets = [0, 0, 16], sizes = [2, 8, 16], strides = [1, 1, 1]} : vector<2x8x32xf32> to vector<2x8x16xf32>
    %208 = vector.extract_strided_slice %185 {offsets = [0, 0, 16], sizes = [2, 8, 16], strides = [1, 1, 1]} : vector<2x8x32xf32> to vector<2x8x16xf32>
    %209 = vector.extract_strided_slice %187 {offsets = [0, 0, 16], sizes = [2, 8, 16], strides = [1, 1, 1]} : vector<2x8x32xf32> to vector<2x8x16xf32>
    "tpu.trace_start"() <{level = 10 : i32, message = "bqd,bkd->bqk"}> : () -> ()
    %cst_64 = arith.constant dense<0.000000e+00> : vector<2x8x8xf32>
    %210 = tpu.matmul %207, %208, %cst_64 {dimension_numbers = #tpu.dot_dimension_numbers<[2], [2], [1], [1], [0, 0, 0, 1, 1, 1], [0], [0]>} : vector<2x8x16xf32>, vector<2x8x16xf32>, vector<2x8x8xf32> -> vector<2x8x8xf32>
    "tpu.trace_stop"() : () -> ()
    %cst_65 = arith.constant 2.500000e-01 : f32
    %211 = vector.broadcast %cst_65 : f32 to vector<2x8x8xf32>
    %212 = arith.mulf %210, %211 : vector<2x8x8xf32>
    %213 = vector.broadcast %26 : vector<2x1x8xf32> to vector<2x8x8xf32>
    %214 = arith.addf %212, %213 : vector<2x8x8xf32>
    %cst_66 = arith.constant dense<0xFF800000> : vector<2x8xf32>
    %215 = vector.multi_reduction <maximumf>, %214, %cst_66 [2] : vector<2x8x8xf32> to vector<2x8xf32>
    %216 = vector.shape_cast %215 : vector<2x8xf32> to vector<2x8x1xf32>
    %217 = vector.broadcast %216 : vector<2x8x1xf32> to vector<2x8x8xf32>
    %218 = arith.subf %214, %217 : vector<2x8x8xf32>
    %219 = math.exp %218 : vector<2x8x8xf32>
    %cst_67 = arith.constant dense<0.000000e+00> : vector<2x8xf32>
    %220 = vector.multi_reduction <add>, %219, %cst_67 [2] : vector<2x8x8xf32> to vector<2x8xf32>
    %221 = vector.shape_cast %220 : vector<2x8xf32> to vector<2x8x1xf32>
    %222 = tpu.reciprocal %221 {approx = true} : vector<2x8x1xf32> -> vector<2x8x1xf32>
    %223 = vector.broadcast %222 : vector<2x8x1xf32> to vector<2x8x8xf32>
    %224 = arith.mulf %219, %223 : vector<2x8x8xf32>
    "tpu.trace_start"() <{level = 10 : i32, message = "bqk,bkd->bqd"}> : () -> ()
    %cst_68 = arith.constant dense<0.000000e+00> : vector<2x8x16xf32>
    %225 = tpu.matmul %224, %209, %cst_68 {dimension_numbers = #tpu.dot_dimension_numbers<[2], [1], [1], [2], [0, 0, 0, 1, 1, 2], [0], [0]>} : vector<2x8x8xf32>, vector<2x8x16xf32>, vector<2x8x16xf32> -> vector<2x8x16xf32>
    "tpu.trace_stop"() : () -> ()
    %226 = tpu.concatenate %206, %225 in 2 : vector<2x8x16xf32>, vector<2x8x16xf32> -> vector<2x8x32xf32>
    %227 = vector.shape_cast %226 : vector<2x8x32xf32> to vector<16x32xf32>
    %228 = arith.truncf %227 : vector<16x32xf32> to vector<16x32xbf16>
    %c1_69 = arith.constant 1 : index
    %c0_70 = arith.constant 0 : index
    %c0_71 = arith.constant 0 : index
    %229 = vector.load %arg5[%c1_69, %c0_70, %c0_71] : memref<2x32x32xbf16, #tpu.memory_space<vmem>>, vector<1x32x32xbf16>
    %230 = vector.shape_cast %229 : vector<1x32x32xbf16> to vector<32x32xbf16>
    %cst_72 = arith.constant dense<0.000000e+00> : vector<16x32xf32>
    %231 = tpu.matmul %228, %230, %cst_72 {dimension_numbers = #tpu.dot_dimension_numbers<[1], [0], [0], [1], [0, 0, 1, 1], [], []>} : vector<16x32xbf16>, vector<32x32xbf16>, vector<16x32xf32> -> vector<16x32xf32>
    %232 = vector.broadcast %169 : vector<1x32xf32> to vector<16x32xf32>
    %233 = arith.addf %231, %232 : vector<16x32xf32>
    %234 = arith.addf %233, %165 : vector<16x32xf32>
    %cst_73 = arith.constant dense<0.000000e+00> : vector<16xf32>
    %235 = vector.multi_reduction <add>, %234, %cst_73 [1] : vector<16x32xf32> to vector<16xf32>
    %236 = vector.shape_cast %235 : vector<16xf32> to vector<16x1xf32>
    %cst_74 = arith.constant 3.200000e+01 : f32
    %237 = vector.broadcast %cst_74 : f32 to vector<16x1xf32>
    %238 = arith.divf %236, %237 : vector<16x1xf32>
    %239 = vector.broadcast %238 : vector<16x1xf32> to vector<16x32xf32>
    %240 = arith.subf %234, %239 : vector<16x32xf32>
    %241 = arith.mulf %240, %240 : vector<16x32xf32>
    %cst_75 = arith.constant dense<0.000000e+00> : vector<16xf32>
    %242 = vector.multi_reduction <add>, %241, %cst_75 [1] : vector<16x32xf32> to vector<16xf32>
    %243 = vector.shape_cast %242 : vector<16xf32> to vector<16x1xf32>
    %cst_76 = arith.constant 3.200000e+01 : f32
    %244 = vector.broadcast %cst_76 : f32 to vector<16x1xf32>
    %245 = arith.divf %243, %244 : vector<16x1xf32>
    %246 = vector.broadcast %238 : vector<16x1xf32> to vector<16x32xf32>
    %247 = arith.subf %234, %246 : vector<16x32xf32>
    %cst_77 = arith.constant 9.99999997E-7 : f32
    %248 = vector.broadcast %cst_77 : f32 to vector<16x1xf32>
    %249 = arith.addf %245, %248 : vector<16x1xf32>
    %250 = math.rsqrt %249 : vector<16x1xf32>
    %251 = vector.broadcast %250 : vector<16x1xf32> to vector<16x32xf32>
    %252 = arith.mulf %247, %251 : vector<16x32xf32>
    %253 = vector.broadcast %170 : vector<1x32xf32> to vector<16x32xf32>
    %254 = arith.mulf %252, %253 : vector<16x32xf32>
    %255 = vector.broadcast %171 : vector<1x32xf32> to vector<16x32xf32>
    %256 = arith.addf %254, %255 : vector<16x32xf32>
    %257 = arith.truncf %256 : vector<16x32xf32> to vector<16x32xbf16>
    %c1_78 = arith.constant 1 : index
    %c0_79 = arith.constant 0 : index
    %c0_80 = arith.constant 0 : index
    %258 = vector.load %arg6[%c1_78, %c0_79, %c0_80] : memref<2x32x64xbf16, #tpu.memory_space<vmem>>, vector<1x32x64xbf16>
    %259 = vector.shape_cast %258 : vector<1x32x64xbf16> to vector<32x64xbf16>
    %cst_81 = arith.constant dense<0.000000e+00> : vector<16x64xf32>
    %260 = tpu.matmul %257, %259, %cst_81 {dimension_numbers = #tpu.dot_dimension_numbers<[1], [0], [0], [1], [0, 0, 1, 1], [], []>} : vector<16x32xbf16>, vector<32x64xbf16>, vector<16x64xf32> -> vector<16x64xf32>
    %261 = vector.broadcast %172 : vector<1x64xf32> to vector<16x64xf32>
    %262 = arith.addf %260, %261 : vector<16x64xf32>
    %cst_82 = arith.constant 5.000000e-01 : f32
    %263 = vector.broadcast %cst_82 : f32 to vector<16x64xf32>
    %264 = arith.mulf %263, %262 : vector<16x64xf32>
    %cst_83 = arith.constant 4.471500e-02 : f32
    %265 = vector.broadcast %cst_83 : f32 to vector<16x64xf32>
    %266 = arith.mulf %265, %262 : vector<16x64xf32>
    %267 = arith.mulf %266, %262 : vector<16x64xf32>
    %268 = arith.mulf %267, %262 : vector<16x64xf32>
    %269 = arith.addf %262, %268 : vector<16x64xf32>
    %cst_84 = arith.constant 0.797884583 : f32
    %270 = vector.broadcast %cst_84 : f32 to vector<16x64xf32>
    %271 = arith.mulf %270, %269 : vector<16x64xf32>
    %272 = math.tanh %271 : vector<16x64xf32>
    %cst_85 = arith.constant 1.000000e+00 : f32
    %273 = vector.broadcast %cst_85 : f32 to vector<16x64xf32>
    %274 = arith.addf %273, %272 : vector<16x64xf32>
    %275 = arith.mulf %264, %274 : vector<16x64xf32>
    %276 = arith.truncf %275 : vector<16x64xf32> to vector<16x64xbf16>
    %c1_86 = arith.constant 1 : index
    %c0_87 = arith.constant 0 : index
    %c0_88 = arith.constant 0 : index
    %277 = vector.load %arg7[%c1_86, %c0_87, %c0_88] : memref<2x64x32xbf16, #tpu.memory_space<vmem>>, vector<1x64x32xbf16>
    %278 = vector.shape_cast %277 : vector<1x64x32xbf16> to vector<64x32xbf16>
    %cst_89 = arith.constant dense<0.000000e+00> : vector<16x32xf32>
    %279 = tpu.matmul %276, %278, %cst_89 {dimension_numbers = #tpu.dot_dimension_numbers<[1], [0], [0], [1], [0, 0, 1, 1], [], []>} : vector<16x64xbf16>, vector<64x32xbf16>, vector<16x32xf32> -> vector<16x32xf32>
    %280 = vector.broadcast %173 : vector<1x32xf32> to vector<16x32xf32>
    %281 = arith.addf %279, %280 : vector<16x32xf32>
    %282 = arith.addf %281, %256 : vector<16x32xf32>
    %cst_90 = arith.constant dense<0.000000e+00> : vector<16xf32>
    %283 = vector.multi_reduction <add>, %282, %cst_90 [1] : vector<16x32xf32> to vector<16xf32>
    %284 = vector.shape_cast %283 : vector<16xf32> to vector<16x1xf32>
    %cst_91 = arith.constant 3.200000e+01 : f32
    %285 = vector.broadcast %cst_91 : f32 to vector<16x1xf32>
    %286 = arith.divf %284, %285 : vector<16x1xf32>
    %287 = vector.broadcast %286 : vector<16x1xf32> to vector<16x32xf32>
    %288 = arith.subf %282, %287 : vector<16x32xf32>
    %289 = arith.mulf %288, %288 : vector<16x32xf32>
    %cst_92 = arith.constant dense<0.000000e+00> : vector<16xf32>
    %290 = vector.multi_reduction <add>, %289, %cst_92 [1] : vector<16x32xf32> to vector<16xf32>
    %291 = vector.shape_cast %290 : vector<16xf32> to vector<16x1xf32>
    %cst_93 = arith.constant 3.200000e+01 : f32
    %292 = vector.broadcast %cst_93 : f32 to vector<16x1xf32>
    %293 = arith.divf %291, %292 : vector<16x1xf32>
    %294 = vector.broadcast %286 : vector<16x1xf32> to vector<16x32xf32>
    %295 = arith.subf %282, %294 : vector<16x32xf32>
    %cst_94 = arith.constant 9.99999997E-7 : f32
    %296 = vector.broadcast %cst_94 : f32 to vector<16x1xf32>
    %297 = arith.addf %293, %296 : vector<16x1xf32>
    %298 = math.rsqrt %297 : vector<16x1xf32>
    %299 = vector.broadcast %298 : vector<16x1xf32> to vector<16x32xf32>
    %300 = arith.mulf %295, %299 : vector<16x32xf32>
    %301 = vector.broadcast %174 : vector<1x32xf32> to vector<16x32xf32>
    %302 = arith.mulf %300, %301 : vector<16x32xf32>
    %303 = vector.broadcast %175 : vector<1x32xf32> to vector<16x32xf32>
    %304 = arith.addf %302, %303 : vector<16x32xf32>
    %c0_95 = arith.constant 0 : index
    %c0_96 = arith.constant 0 : index
    %c0_97 = arith.constant 0 : index
    %305 = vector.load %arg3[%c0_95, %c0_96, %c0_97] : memref<2x32x128xbf16, #tpu.memory_space<vmem>>, vector<1x32x128xbf16>
    %306 = vector.shape_cast %305 : vector<1x32x128xbf16> to vector<32x128xbf16>
    %c1_98 = arith.constant 1 : index
    %c0_99 = arith.constant 0 : index
    %c0_100 = arith.constant 0 : index
    %307 = vector.load %arg3[%c1_98, %c0_99, %c0_100] : memref<2x32x128xbf16, #tpu.memory_space<vmem>>, vector<1x32x128xbf16>
    %308 = vector.shape_cast %307 : vector<1x32x128xbf16> to vector<32x128xbf16>
    %309 = vector.extract_strided_slice %0 {offsets = [2, 0], sizes = [1, 32], strides = [1, 1]} : vector<8x128xf32> to vector<1x32xf32>
    %310 = vector.extract_strided_slice %0 {offsets = [3, 0], sizes = [1, 32], strides = [1, 1]} : vector<8x128xf32> to vector<1x32xf32>
    %311 = vector.extract_strided_slice %0 {offsets = [4, 0], sizes = [1, 32], strides = [1, 1]} : vector<8x128xf32> to vector<1x32xf32>
    %312 = vector.extract_strided_slice %0 {offsets = [5, 0], sizes = [1, 128], strides = [1, 1]} : vector<8x128xf32> to vector<1x128xf32>
    %313 = arith.truncf %304 : vector<16x32xf32> to vector<16x32xbf16>
    %314 = vector.extract_strided_slice %306 {offsets = [0, 0], sizes = [32, 32], strides = [1, 1]} : vector<32x128xbf16> to vector<32x32xbf16>
    %cst_101 = arith.constant dense<0.000000e+00> : vector<16x32xf32>
    %315 = tpu.matmul %313, %314, %cst_101 {dimension_numbers = #tpu.dot_dimension_numbers<[1], [0], [0], [1], [0, 0, 1, 1], [], []>} : vector<16x32xbf16>, vector<32x32xbf16>, vector<16x32xf32> -> vector<16x32xf32>
    %316 = vector.broadcast %309 : vector<1x32xf32> to vector<16x32xf32>
    %317 = arith.addf %315, %316 : vector<16x32xf32>
    %cst_102 = arith.constant 5.000000e-01 : f32
    %318 = vector.broadcast %cst_102 : f32 to vector<16x32xf32>
    %319 = arith.mulf %318, %317 : vector<16x32xf32>
    %cst_103 = arith.constant 4.471500e-02 : f32
    %320 = vector.broadcast %cst_103 : f32 to vector<16x32xf32>
    %321 = arith.mulf %320, %317 : vector<16x32xf32>
    %322 = arith.mulf %321, %317 : vector<16x32xf32>
    %323 = arith.mulf %322, %317 : vector<16x32xf32>
    %324 = arith.addf %317, %323 : vector<16x32xf32>
    %cst_104 = arith.constant 0.797884583 : f32
    %325 = vector.broadcast %cst_104 : f32 to vector<16x32xf32>
    %326 = arith.mulf %325, %324 : vector<16x32xf32>
    %327 = math.tanh %326 : vector<16x32xf32>
    %cst_105 = arith.constant 1.000000e+00 : f32
    %328 = vector.broadcast %cst_105 : f32 to vector<16x32xf32>
    %329 = arith.addf %328, %327 : vector<16x32xf32>
    %330 = arith.mulf %319, %329 : vector<16x32xf32>
    %cst_106 = arith.constant dense<0.000000e+00> : vector<16xf32>
    %331 = vector.multi_reduction <add>, %330, %cst_106 [1] : vector<16x32xf32> to vector<16xf32>
    %332 = vector.shape_cast %331 : vector<16xf32> to vector<16x1xf32>
    %cst_107 = arith.constant 3.200000e+01 : f32
    %333 = vector.broadcast %cst_107 : f32 to vector<16x1xf32>
    %334 = arith.divf %332, %333 : vector<16x1xf32>
    %335 = vector.broadcast %334 : vector<16x1xf32> to vector<16x32xf32>
    %336 = arith.subf %330, %335 : vector<16x32xf32>
    %337 = arith.mulf %336, %336 : vector<16x32xf32>
    %cst_108 = arith.constant dense<0.000000e+00> : vector<16xf32>
    %338 = vector.multi_reduction <add>, %337, %cst_108 [1] : vector<16x32xf32> to vector<16xf32>
    %339 = vector.shape_cast %338 : vector<16xf32> to vector<16x1xf32>
    %cst_109 = arith.constant 3.200000e+01 : f32
    %340 = vector.broadcast %cst_109 : f32 to vector<16x1xf32>
    %341 = arith.divf %339, %340 : vector<16x1xf32>
    %342 = vector.broadcast %334 : vector<16x1xf32> to vector<16x32xf32>
    %343 = arith.subf %330, %342 : vector<16x32xf32>
    %cst_110 = arith.constant 9.99999997E-7 : f32
    %344 = vector.broadcast %cst_110 : f32 to vector<16x1xf32>
    %345 = arith.addf %341, %344 : vector<16x1xf32>
    %346 = math.rsqrt %345 : vector<16x1xf32>
    %347 = vector.broadcast %346 : vector<16x1xf32> to vector<16x32xf32>
    %348 = arith.mulf %343, %347 : vector<16x32xf32>
    %349 = vector.broadcast %310 : vector<1x32xf32> to vector<16x32xf32>
    %350 = arith.mulf %348, %349 : vector<16x32xf32>
    %351 = vector.broadcast %311 : vector<1x32xf32> to vector<16x32xf32>
    %352 = arith.addf %350, %351 : vector<16x32xf32>
    %353 = arith.truncf %352 : vector<16x32xf32> to vector<16x32xbf16>
    %cst_111 = arith.constant dense<0.000000e+00> : vector<16x128xf32>
    %354 = tpu.matmul %353, %308, %cst_111 {dimension_numbers = #tpu.dot_dimension_numbers<[1], [0], [0], [1], [0, 0, 1, 1], [], []>} : vector<16x32xbf16>, vector<32x128xbf16>, vector<16x128xf32> -> vector<16x128xf32>
    %355 = vector.broadcast %312 : vector<1x128xf32> to vector<16x128xf32>
    %356 = arith.addf %354, %355 : vector<16x128xf32>
    %cst_112 = arith.constant dense<0xFF800000> : vector<16xf32>
    %357 = vector.multi_reduction <maximumf>, %356, %cst_112 [1] : vector<16x128xf32> to vector<16xf32>
    %358 = vector.shape_cast %357 : vector<16xf32> to vector<16x1xf32>
    %359 = vector.broadcast %358 : vector<16x1xf32> to vector<16x128xf32>
    %360 = arith.subf %356, %359 : vector<16x128xf32>
    %361 = math.exp %360 : vector<16x128xf32>
    %cst_113 = arith.constant dense<0.000000e+00> : vector<16xf32>
    %362 = vector.multi_reduction <add>, %361, %cst_113 [1] : vector<16x128xf32> to vector<16xf32>
    %363 = vector.shape_cast %362 : vector<16xf32> to vector<16x1xf32>
    %364 = vector.broadcast %363 : vector<16x1xf32> to vector<16x128xf32>
    %365 = arith.divf %361, %364 : vector<16x128xf32>
    %c0_114 = arith.constant 0 : index
    %c0_115 = arith.constant 0 : index
    %366 = vector.load %arg9[%c0_114, %c0_115] : memref<16x128xf32, #tpu.memory_space<vmem>>, vector<16x128xf32>
    tpu.vector_store %arg9[%c0_114, %c0_115], %365 {strides = array<i32>} : memref<16x128xf32, #tpu.memory_space<vmem>>, vector<16x128xf32>,
    return
  }
}

</mosaic_0001>

<llo_original>
// kernel: cloze_forward.1
$region0: #{cloze_forward.1}
  #allocation0 [shape = 'u32[]', space=smem, size = 0x4, offset = 0x4, fixed_abs, tag = 'smem constant byte address 0x4 - core index']
  #allocation1 [shape = 'u32[144,128]{1,0:T(1,128)}', space=vmem, size = 0x12000, scoped, tag = 'internal scratch']
  %s0 = inlined_call_operand.vmem [shape: f32[16,32], index: 0, kind: input, shape index: {}]
  %s1 = inlined_call_operand.vmem [shape: f32[2,1,8], index: 1, kind: input, shape index: {}]
  %s2 = inlined_call_operand.vmem [shape: f32[8,128], index: 2, kind: input, shape index: {}]
  %s3 = inlined_call_operand.vmem [shape: bf16[2,32,128], index: 3, kind: input, shape index: {}]
  %s4 = inlined_call_operand.vmem [shape: bf16[2,32,96], index: 4, kind: input, shape index: {}]
  %s5 = inlined_call_operand.vmem [shape: bf16[2,32,32], index: 5, kind: input, shape index: {}]
  %s6 = inlined_call_operand.vmem [shape: bf16[2,32,64], index: 6, kind: input, shape index: {}]
  %s7 = inlined_call_operand.vmem [shape: bf16[2,64,32], index: 7, kind: input, shape index: {}]
  %s8 = inlined_call_operand.vmem [shape: f32[2,8,128], index: 8, kind: input, shape index: {}]
  %s9 = inlined_call_operand.vmem [shape: f32[16,128], index: 9, kind: output, shape index: {}]
  %s10 = sld [smem:[#allocation0]]
  $region46: #{cloze_forward.1} parent=0
    _
  %s12 = ssub.s32 1, %s10
  %s13 = scalar_select 0, %s12, %s10
  // Predicated region
  $region2: #{cloze_forward.1} parent=0 // pred_check
    _
  $region3: #{cloze_forward.1} parent=0 // pred_check_branch
    %15 = sbr.rel (0) target = $region5
  $region4: #{cloze_forward.1} parent=0 // pred_region
    _
  $region5: #{cloze_forward.1} parent=0 // pred_fallthru
    _
  // Predicated region
  $region6: #{cloze_forward.1} parent=0 // pred_check
    _
  $region7: #{cloze_forward.1} parent=0 // pred_check_branch
    %17 = sbr.rel (0) target = $region9
  $region8: #{cloze_forward.1} parent=0 // pred_region
    _
  $region9: #{cloze_forward.1} parent=0 // pred_fallthru
    _
  // Predicated region
  $region10: #{cloze_forward.1} parent=0 // pred_check
    _
  $region11: #{cloze_forward.1} parent=0 // pred_check_branch
    %19 = sbr.rel (0) target = $region13
  $region12: #{cloze_forward.1} parent=0 // pred_region
    _
  $region13: #{cloze_forward.1} parent=0 // pred_fallthru
    _
  // Predicated region
  $region14: #{cloze_forward.1} parent=0 // pred_check
    _
  $region15: #{cloze_forward.1} parent=0 // pred_check_branch
    %21 = sbr.rel (0) target = $region17
  $region16: #{cloze_forward.1} parent=0 // pred_region
    _
  $region17: #{cloze_forward.1} parent=0 // pred_fallthru
    _
  // Predicated region
  $region18: #{cloze_forward.1} parent=0 // pred_check
    _
  $region19: #{cloze_forward.1} parent=0 // pred_check_branch
    %23 = sbr.rel (0) target = $region21
  $region20: #{cloze_forward.1} parent=0 // pred_region
    _
  $region21: #{cloze_forward.1} parent=0 // pred_fallthru
    _
  // Predicated region
  $region22: #{cloze_forward.1} parent=0 // pred_check
    _
  $region23: #{cloze_forward.1} parent=0 // pred_check_branch
    %25 = sbr.rel (0) target = $region25
  $region24: #{cloze_forward.1} parent=0 // pred_region
    _
  $region25: #{cloze_forward.1} parent=0 // pred_fallthru
    _
  // Predicated region
  $region26: #{cloze_forward.1} parent=0 // pred_check
    _
  $region27: #{cloze_forward.1} parent=0 // pred_check_branch
    %27 = sbr.rel (0) target = $region29
  $region28: #{cloze_forward.1} parent=0 // pred_region
    _
  $region29: #{cloze_forward.1} parent=0 // pred_fallthru
    _
  // Predicated region
  $region30: #{cloze_forward.1} parent=0 // pred_check
    _
  $region31: #{cloze_forward.1} parent=0 // pred_check_branch
    %29 = sbr.rel (0) target = $region33
  $region32: #{cloze_forward.1} parent=0 // pred_region
    _
  $region33: #{cloze_forward.1} parent=0 // pred_fallthru
    _
  // Predicated region
  $region34: #{cloze_forward.1} parent=0 // pred_check
    _
  $region35: #{cloze_forward.1} parent=0 // pred_check_branch
    %31 = sbr.rel (0) target = $region37
  $region36: #{cloze_forward.1} parent=0 // pred_region
    _
  $region37: #{cloze_forward.1} parent=0 // pred_fallthru
    _
  %v33 = vld [vmem:[%s2] sm:$0xff]
  %v34 = vld [vmem:[%s0] sm:$0xff]
  %v35 = vld [vmem:[%s0 + $0x8] sm:$0xff]
  %vm36 = vcmask 261120
  %v37 = vsel %vm36, %v34, 0.0
  %38 = vadd.xlane.f32.xlu0 %v37
  %v39 = vpop.xlane.xlu0 %38
  %v40 = vsel %vm36, %v35, 0.0
  %41 = vadd.xlane.f32.xlu0 %v40
  %v42 = vpop.xlane.xlu0 %41
  %v43 = vrcp.pop 32.0
  %v44 = vmul.f32 %v39, %v43
  %v45 = vmul.f32 %v42, %v43
  %v46 = vsub.f32 %v34, %v44
  %v47 = vsub.f32 %v35, %v45
  %v48 = vmul.f32 %v46, %v46
  %v49 = vmul.f32 %v47, %v47
  %v50 = vsel %vm36, %v48, 0.0
  %51 = vadd.xlane.f32.xlu0 %v50
  %v52 = vpop.xlane.xlu0 %51
  %v53 = vsel %vm36, %v49, 0.0
  %54 = vadd.xlane.f32.xlu0 %v53
  %v55 = vpop.xlane.xlu0 %54
  %v56 = vmul.f32 %v52, %v43
  %v57 = vmul.f32 %v55, %v43
  %v58 = vadd.f32 %v56, 1e-06
  %v59 = vadd.f32 %v57, 1e-06
  %v60 = vrsqrt.pop %v58
  %v61 = vrsqrt.pop %v59
  %v62 = vmul.f32 %v46, %v60
  %v63 = vmul.f32 %v47, %v61
  %v64 = vlaneseq
  %v65 = vshrl.u32 %v64, 7
  %v66 = vsub.s32 0, %v65
  %v67 = vrot.slane %v33, %v66
  %v68 = vmul.f32 %v62, %v67
  %v69 = vmul.f32 %v63, %v67
  %v70 = vlaneseq
  %v71 = vshrl.u32 %v70, 7
  %v72 = vsub.s32 1, %v71
  %v73 = vrot.slane %v33, %v72
  %v74 = vadd.f32 %v68, %v73
  %v75 = vadd.f32 %v69, %v73
  %v76 = vld [vmem:[%s1] sm:$0x1]
  %v77 = vld [vmem:[%s1 + $0x1] sm:$0x1]
  %v78 = vld [vmem:[%s8] sm:$0xff]
  %v79 = vpack.c.bf16 %v75, %v74
  %v80 = vld [vmem:[%s4] sm:$0xf]
  %v81 = vld [vmem:[%s4 + $0x4] sm:$0xf]
  %v82 = vld [vmem:[%s4 + $0x8] sm:$0xf]
  %v83 = vld [vmem:[%s4 + $0xc] sm:$0xf]
  %v84 = vlaneseq
  %v85 = vshrl.u32 %v84, 7
  %v86 = vsub.s32 0, %v85
  %v87 = vrot.slane %v78, %v86
  %v92 = vunpack.c.l.b16 %v80
  %v93 = vunpack.c.l.b16 %v81
  %v94 = vunpack.c.l.b16 %v82
  %v95 = vunpack.c.l.b16 %v83
  %v96 = vpack.c.b16 %v93, %v92
  %v97 = vpack.c.b16 %v95, %v94
  %v101 = vsel %vm36, %v79, 0
  %103 = vmatprep.subr.bf16.mxu0 0
  %104 = vmatpush1.bf16.msra.mxu0 0
  %105 = vmatprep.subr.bf16.mxu0 0
  %106 = vmatpush1.bf16.msra.mxu0 0
  %107 = vmatprep.subr.bf16.mxu0 0
  %108 = vmatpush1.bf16.msra.mxu0 0
  %109 = vmatprep.subr.bf16.mxu0 0
  %110 = vmatpush1.bf16.msra.mxu0 0
  %111 = vmatprep.subr.bf16.mxu0 0
  %112 = vmatpush1.bf16.msra.mxu0 0
  %113 = vmatprep.subr.bf16.mxu0 0
  %114 = vmatpush1.bf16.msra.mxu0 0
  %115 = vmatprep.subr.bf16.mxu0 0
  %116 = vmatpush1.bf16.msra.mxu0 %v97
  %117 = vmatprep.subr.bf16.mxu0 0
  %118 = vmatpush1.bf16.msra.mxu0 %v96
  %119 = vmatprep.subr.bf16.mxu0 0
  %120 = vmatpush2.bf16.msra.mxu0 0
  %121 = vmatprep.subr.bf16.mxu0 0
  %122 = vmatpush2.bf16.msra.mxu0 0
  %123 = vmatprep.subr.bf16.mxu0 0
  %124 = vmatpush2.bf16.msra.mxu0 0
  %125 = vmatprep.subr.bf16.mxu0 0
  %126 = vmatpush2.bf16.msra.mxu0 0
  %127 = vmatprep.subr.bf16.mxu0 0
  %128 = vmatpush2.bf16.msra.mxu0 0
  %129 = vmatprep.subr.bf16.mxu0 0
  %130 = vmatpush2.bf16.msra.mxu0 0
  %131 = vmatprep.subr.bf16.mxu0 0
  %132 = vmatpush2.bf16.msra.mxu0 0
  %133 = vmatprep.subr.bf16.mxu0 0
  %134 = vmatpush2.bf16.msra.mxu0 0
  %135 = vmatprep.mubr.bf16.mxu0 0
  %136 = vmatmul.mubr.bf16.gmra.mxu0 %v101
  %v137 = vpop.f32.mrf.mxu0
  %v138 = vadd.f32 %v87, %v137
  %v139 = vpop.f32.mrf.mxu0
  %v140 = vpop.f32.mrf.mxu0
  %v141 = vadd.f32 %v87, %v140
  %v142 = vpop.f32.mrf.mxu0
  %143 = vdwg.mxu0
  %145 = vrot.lane.b32.xlu0 %v138, 96
  %v146 = vpop.permute.xlu0 %145
  %vm147 = vcmask 130048
  %v148 = vsel %vm147, %v138, 0
  %v150 = vsel %vm147, %v146, 0
  %152 = vmatprep.subr.mxu0 0.0
  %153 = vmatpush1.xpose.msra.mxu0 0.0
  %154 = vmatprep.subr.mxu0 0.0
  %155 = vmatpush1.xpose.msra.mxu0 0.0
  %156 = vmatprep.subr.mxu0 0.0
  %157 = vmatpush1.xpose.msra.mxu0 0.0
  %158 = vmatprep.subr.mxu0 0.0
  %159 = vmatpush1.xpose.msra.mxu0 0.0
  %160 = vmatprep.subr.mxu0 0.0
  %161 = vmatpush1.xpose.msra.mxu0 0.0
  %162 = vmatprep.subr.mxu0 0.0
  %163 = vmatpush1.xpose.msra.mxu0 0.0
  %164 = vmatprep.subr.mxu0 0.0
  %165 = vmatpush1.xpose.msra.mxu0 0.0
  %166 = vmatprep.subr.mxu0 0.0
  %167 = vmatpush1.xpose.msra.mxu0 0.0
  %168 = vmatprep.subr.mxu0 0.0
  %169 = vmatpush1.xpose.msra.mxu0 0.0
  %170 = vmatprep.subr.mxu0 0.0
  %171 = vmatpush1.xpose.msra.mxu0 0.0
  %172 = vmatprep.subr.mxu0 0.0
  %173 = vmatpush1.xpose.msra.mxu0 0.0
  %174 = vmatprep.subr.mxu0 0.0
  %175 = vmatpush1.xpose.msra.mxu0 0.0
  %176 = vmatprep.subr.mxu0 0.0
  %177 = vmatpush1.xpose.msra.mxu0 0.0
  %178 = vmatprep.subr.mxu0 0.0
  %179 = vmatpush1.xpose.msra.mxu0 0.0
  %180 = vmatprep.subr.mxu0 0.0
  %181 = vmatpush1.xpose.msra.mxu0 0.0
  %182 = vmatprep.subr.mxu0 0.0
  %183 = vmatpush1.xpose.msra.mxu0 %v150
  %184 = vmatprep.subr.mxu0 0.0
  %185 = vmatpush2.xpose.msra.mxu0 0.0
  %186 = vmatprep.subr.mxu0 0.0
  %187 = vmatpush2.xpose.msra.mxu0 0.0
  %188 = vmatprep.subr.mxu0 0.0
  %189 = vmatpush2.xpose.msra.mxu0 0.0
  %190 = vmatprep.subr.mxu0 0.0
  %191 = vmatpush2.xpose.msra.mxu0 0.0
  %192 = vmatprep.subr.mxu0 0.0
  %193 = vmatpush2.xpose.msra.mxu0 0.0
  %194 = vmatprep.subr.mxu0 0.0
  %195 = vmatpush2.xpose.msra.mxu0 0.0
  %196 = vmatprep.subr.mxu0 0.0
  %197 = vmatpush2.xpose.msra.mxu0 0.0
  %198 = vmatprep.subr.mxu0 0.0
  %199 = vmatpush2.xpose.msra.mxu0 0.0
  %200 = vmatprep.subr.mxu0 0.0
  %201 = vmatpush2.xpose.msra.mxu0 0.0
  %202 = vmatprep.subr.mxu0 0.0
  %203 = vmatpush2.xpose.msra.mxu0 0.0
  %204 = vmatprep.subr.mxu0 0.0
  %205 = vmatpush2.xpose.msra.mxu0 0.0
  %206 = vmatprep.subr.mxu0 0.0
  %207 = vmatpush2.xpose.msra.mxu0 0.0
  %208 = vmatprep.subr.mxu0 0.0
  %209 = vmatpush2.xpose.msra.mxu0 0.0
  %210 = vmatprep.subr.mxu0 0.0
  %211 = vmatpush2.xpose.msra.mxu0 0.0
  %212 = vmatprep.subr.mxu0 0.0
  %213 = vmatpush2.xpose.msra.mxu0 0.0
  %214 = vmatprep.subr.mxu0 0.0
  %215 = vmatpush2.xpose.msra.mxu0 0.0
  %216 = vmatprep.mubr.f32.mxu0 0.0
  %217 = vmatmul.mubr.f32.gmra.mxu0 %v148
  %v218 = vpop.f32.mrf.mxu0
  %v219 = vadd.f32 0.0, %v218
  %v220 = vpop.f32.mrf.mxu0
  %221 = vdwg.mxu0
  %223 = vrot.lane.b32.xlu0 %v141, 96
  %v224 = vpop.permute.xlu0 %223
  %v225 = vsel %vm147, %v141, 0
  %v227 = vsel %vm147, %v224, 0
  %229 = vmatprep.subr.mxu0 0.0
  %230 = vmatpush1.xpose.msra.mxu0 0.0
  %231 = vmatprep.subr.mxu0 0.0
  %232 = vmatpush1.xpose.msra.mxu0 0.0
  %233 = vmatprep.subr.mxu0 0.0
  %234 = vmatpush1.xpose.msra.mxu0 0.0
  %235 = vmatprep.subr.mxu0 0.0
  %236 = vmatpush1.xpose.msra.mxu0 0.0
  %237 = vmatprep.subr.mxu0 0.0
  %238 = vmatpush1.xpose.msra.mxu0 0.0
  %239 = vmatprep.subr.mxu0 0.0
  %240 = vmatpush1.xpose.msra.mxu0 0.0
  %241 = vmatprep.subr.mxu0 0.0
  %242 = vmatpush1.xpose.msra.mxu0 0.0
  %243 = vmatprep.subr.mxu0 0.0
  %244 = vmatpush1.xpose.msra.mxu0 0.0
  %245 = vmatprep.subr.mxu0 0.0
  %246 = vmatpush1.xpose.msra.mxu0 0.0
  %247 = vmatprep.subr.mxu0 0.0
  %248 = vmatpush1.xpose.msra.mxu0 0.0
  %249 = vmatprep.subr.mxu0 0.0
  %250 = vmatpush1.xpose.msra.mxu0 0.0
  %251 = vmatprep.subr.mxu0 0.0
  %252 = vmatpush1.xpose.msra.mxu0 0.0
  %253 = vmatprep.subr.mxu0 0.0
  %254 = vmatpush1.xpose.msra.mxu0 0.0
  %255 = vmatprep.subr.mxu0 0.0
  %256 = vmatpush1.xpose.msra.mxu0 0.0
  %257 = vmatprep.subr.mxu0 0.0
  %258 = vmatpush1.xpose.msra.mxu0 0.0
  %259 = vmatprep.subr.mxu0 0.0
  %260 = vmatpush1.xpose.msra.mxu0 %v227
  %261 = vmatprep.subr.mxu0 0.0
  %262 = vmatpush2.xpose.msra.mxu0 0.0
  %263 = vmatprep.subr.mxu0 0.0
  %264 = vmatpush2.xpose.msra.mxu0 0.0
  %265 = vmatprep.subr.mxu0 0.0
  %266 = vmatpush2.xpose.msra.mxu0 0.0
  %267 = vmatprep.subr.mxu0 0.0
  %268 = vmatpush2.xpose.msra.mxu0 0.0
  %269 = vmatprep.subr.mxu0 0.0
  %270 = vmatpush2.xpose.msra.mxu0 0.0
  %271 = vmatprep.subr.mxu0 0.0
  %272 = vmatpush2.xpose.msra.mxu0 0.0
  %273 = vmatprep.subr.mxu0 0.0
  %274 = vmatpush2.xpose.msra.mxu0 0.0
  %275 = vmatprep.subr.mxu0 0.0
  %276 = vmatpush2.xpose.msra.mxu0 0.0
  %277 = vmatprep.subr.mxu0 0.0
  %278 = vmatpush2.xpose.msra.mxu0 0.0
  %279 = vmatprep.subr.mxu0 0.0
  %280 = vmatpush2.xpose.msra.mxu0 0.0
  %281 = vmatprep.subr.mxu0 0.0
  %282 = vmatpush2.xpose.msra.mxu0 0.0
  %283 = vmatprep.subr.mxu0 0.0
  %284 = vmatpush2.xpose.msra.mxu0 0.0
  %285 = vmatprep.subr.mxu0 0.0
  %286 = vmatpush2.xpose.msra.mxu0 0.0
  %287 = vmatprep.subr.mxu0 0.0
  %288 = vmatpush2.xpose.msra.mxu0 0.0
  %289 = vmatprep.subr.mxu0 0.0
  %290 = vmatpush2.xpose.msra.mxu0 0.0
  %291 = vmatprep.subr.mxu0 0.0
  %292 = vmatpush2.xpose.msra.mxu0 0.0
  %293 = vmatprep.mubr.f32.mxu0 0.0
  %294 = vmatmul.mubr.f32.gmra.mxu0 %v225
  %v295 = vpop.f32.mrf.mxu0
  %v296 = vadd.f32 0.0, %v295
  %v297 = vpop.f32.mrf.mxu0
  %298 = vdwg.mxu0
  %v299 = vmul.f32 %v219, 0.25
  %v300 = vmul.f32 %v296, 0.25
  %v303 = vlaneseq
  %v304 = vshrl.u32 %v303, 7
  %v305 = vsub.s32 0, %v304
  %v306 = vrot.slane %v76, %v305
  %v307 = vlaneseq
  %v308 = vshrl.u32 %v307, 7
  %v309 = vsub.s32 0, %v308
  %v310 = vrot.slane %v77, %v309
  %v313 = vadd.f32 %v299, %v306
  %v314 = vadd.f32 %v300, %v310
  %vm315 = vcmask 64512
  %v316 = vsel %vm315, %v313, -inf
  %317 = vmax.xlane.f32.xlu0 %v316
  %v318 = vpop.xlane.xlu0 %317
  %v319 = vsel %vm315, %v314, -inf
  %320 = vmax.xlane.f32.xlu0 %v319
  %v321 = vpop.xlane.xlu0 %320
  %v322 = vsub.f32 %v313, %v318
  %v323 = vsub.f32 %v314, %v321
  %v324 = vmul.f32 %v322, 1.442695
  %v325 = vpow.pop %v324
  %v326 = vmul.f32 %v323, 1.442695
  %v327 = vpow.pop %v326
  %v328 = vsel %vm315, %v325, 0.0
  %329 = vadd.xlane.f32.xlu0 %v328
  %v330 = vpop.xlane.xlu0 %329
  %v331 = vsel %vm315, %v327, 0.0
  %332 = vadd.xlane.f32.xlu0 %v331
  %v333 = vpop.xlane.xlu0 %332
  %v334 = vrcp.pop %v330
  %v335 = vrcp.pop %v333
  %v336 = vmul.f32 %v325, %v334
  %v337 = vmul.f32 %v327, %v335
  %338 = vrot.lane.b32.xlu0 %v138, 64
  %v339 = vpop.permute.xlu0 %338
  %v342 = vsel %vm315, %v336, 0
  %344 = vmatprep.subr.mxu0 0.0
  %345 = vmatpush1.msra.mxu0 0.0
  %346 = vmatprep.subr.mxu0 0.0
  %347 = vmatpush1.msra.mxu0 0.0
  %348 = vmatprep.subr.mxu0 0.0
  %349 = vmatpush1.msra.mxu0 0.0
  %350 = vmatprep.subr.mxu0 0.0
  %351 = vmatpush1.msra.mxu0 0.0
  %352 = vmatprep.subr.mxu0 0.0
  %353 = vmatpush1.msra.mxu0 0.0
  %354 = vmatprep.subr.mxu0 0.0
  %355 = vmatpush1.msra.mxu0 0.0
  %356 = vmatprep.subr.mxu0 0.0
  %357 = vmatpush1.msra.mxu0 0.0
  %358 = vmatprep.subr.mxu0 0.0
  %359 = vmatpush1.msra.mxu0 0.0
  %360 = vmatprep.subr.mxu0 0.0
  %361 = vmatpush1.msra.mxu0 0.0
  %362 = vmatprep.subr.mxu0 0.0
  %363 = vmatpush1.msra.mxu0 0.0
  %364 = vmatprep.subr.mxu0 0.0
  %365 = vmatpush1.msra.mxu0 0.0
  %366 = vmatprep.subr.mxu0 0.0
  %367 = vmatpush1.msra.mxu0 0.0
  %368 = vmatprep.subr.mxu0 0.0
  %369 = vmatpush1.msra.mxu0 0.0
  %370 = vmatprep.subr.mxu0 0.0
  %371 = vmatpush1.msra.mxu0 0.0
  %372 = vmatprep.subr.mxu0 0.0
  %373 = vmatpush1.msra.mxu0 0.0
  %374 = vmatprep.subr.mxu0 0.0
  %375 = vmatpush1.msra.mxu0 %v339
  %376 = vmatprep.subr.mxu0 0.0
  %377 = vmatpush2.msra.mxu0 0.0
  %378 = vmatprep.subr.mxu0 0.0
  %379 = vmatpush2.msra.mxu0 0.0
  %380 = vmatprep.subr.mxu0 0.0
  %381 = vmatpush2.msra.mxu0 0.0
  %382 = vmatprep.subr.mxu0 0.0
  %383 = vmatpush2.msra.mxu0 0.0
  %384 = vmatprep.subr.mxu0 0.0
  %385 = vmatpush2.msra.mxu0 0.0
  %386 = vmatprep.subr.mxu0 0.0
  %387 = vmatpush2.msra.mxu0 0.0
  %388 = vmatprep.subr.mxu0 0.0
  %389 = vmatpush2.msra.mxu0 0.0
  %390 = vmatprep.subr.mxu0 0.0
  %391 = vmatpush2.msra.mxu0 0.0
  %392 = vmatprep.subr.mxu0 0.0
  %393 = vmatpush2.msra.mxu0 0.0
  %394 = vmatprep.subr.mxu0 0.0
  %395 = vmatpush2.msra.mxu0 0.0
  %396 = vmatprep.subr.mxu0 0.0
  %397 = vmatpush2.msra.mxu0 0.0
  %398 = vmatprep.subr.mxu0 0.0
  %399 = vmatpush2.msra.mxu0 0.0
  %400 = vmatprep.subr.mxu0 0.0
  %401 = vmatpush2.msra.mxu0 0.0
  %402 = vmatprep.subr.mxu0 0.0
  %403 = vmatpush2.msra.mxu0 0.0
  %404 = vmatprep.subr.mxu0 0.0
  %405 = vmatpush2.msra.mxu0 0.0
  %406 = vmatprep.subr.mxu0 0.0
  %407 = vmatpush2.msra.mxu0 0.0
  %408 = vmatprep.mubr.f32.mxu0 0.0
  %409 = vmatmul.mubr.f32.gmra.mxu0 %v342
  %v410 = vpop.f32.mrf.mxu0
  %v411 = vadd.f32 0.0, %v410
  %v412 = vpop.f32.mrf.mxu0
  %413 = vdwg.mxu0
  %414 = vrot.lane.b32.xlu0 %v141, 64
  %v415 = vpop.permute.xlu0 %414
  %v418 = vsel %vm315, %v337, 0
  %420 = vmatprep.subr.mxu0 0.0
  %421 = vmatpush1.msra.mxu0 0.0
  %422 = vmatprep.subr.mxu0 0.0
  %423 = vmatpush1.msra.mxu0 0.0
  %424 = vmatprep.subr.mxu0 0.0
  %425 = vmatpush1.msra.mxu0 0.0
  %426 = vmatprep.subr.mxu0 0.0
  %427 = vmatpush1.msra.mxu0 0.0
  %428 = vmatprep.subr.mxu0 0.0
  %429 = vmatpush1.msra.mxu0 0.0
  %430 = vmatprep.subr.mxu0 0.0
  %431 = vmatpush1.msra.mxu0 0.0
  %432 = vmatprep.subr.mxu0 0.0
  %433 = vmatpush1.msra.mxu0 0.0
  %434 = vmatprep.subr.mxu0 0.0
  %435 = vmatpush1.msra.mxu0 0.0
  %436 = vmatprep.subr.mxu0 0.0
  %437 = vmatpush1.msra.mxu0 0.0
  %438 = vmatprep.subr.mxu0 0.0
  %439 = vmatpush1.msra.mxu0 0.0
  %440 = vmatprep.subr.mxu0 0.0
  %441 = vmatpush1.msra.mxu0 0.0
  %442 = vmatprep.subr.mxu0 0.0
  %443 = vmatpush1.msra.mxu0 0.0
  %444 = vmatprep.subr.mxu0 0.0
  %445 = vmatpush1.msra.mxu0 0.0
  %446 = vmatprep.subr.mxu0 0.0
  %447 = vmatpush1.msra.mxu0 0.0
  %448 = vmatprep.subr.mxu0 0.0
  %449 = vmatpush1.msra.mxu0 0.0
  %450 = vmatprep.subr.mxu0 0.0
  %451 = vmatpush1.msra.mxu0 %v415
  %452 = vmatprep.subr.mxu0 0.0
  %453 = vmatpush2.msra.mxu0 0.0
  %454 = vmatprep.subr.mxu0 0.0
  %455 = vmatpush2.msra.mxu0 0.0
  %456 = vmatprep.subr.mxu0 0.0
  %457 = vmatpush2.msra.mxu0 0.0
  %458 = vmatprep.subr.mxu0 0.0
  %459 = vmatpush2.msra.mxu0 0.0
  %460 = vmatprep.subr.mxu0 0.0
  %461 = vmatpush2.msra.mxu0 0.0
  %462 = vmatprep.subr.mxu0 0.0
  %463 = vmatpush2.msra.mxu0 0.0
  %464 = vmatprep.subr.mxu0 0.0
  %465 = vmatpush2.msra.mxu0 0.0
  %466 = vmatprep.subr.mxu0 0.0
  %467 = vmatpush2.msra.mxu0 0.0
  %468 = vmatprep.subr.mxu0 0.0
  %469 = vmatpush2.msra.mxu0 0.0
  %470 = vmatprep.subr.mxu0 0.0
  %471 = vmatpush2.msra.mxu0 0.0
  %472 = vmatprep.subr.mxu0 0.0
  %473 = vmatpush2.msra.mxu0 0.0
  %474 = vmatprep.subr.mxu0 0.0
  %475 = vmatpush2.msra.mxu0 0.0
  %476 = vmatprep.subr.mxu0 0.0
  %477 = vmatpush2.msra.mxu0 0.0
  %478 = vmatprep.subr.mxu0 0.0
  %479 = vmatpush2.msra.mxu0 0.0
  %480 = vmatprep.subr.mxu0 0.0
  %481 = vmatpush2.msra.mxu0 0.0
  %482 = vmatprep.subr.mxu0 0.0
  %483 = vmatpush2.msra.mxu0 0.0
  %484 = vmatprep.mubr.f32.mxu0 0.0
  %485 = vmatmul.mubr.f32.gmra.mxu0 %v418
  %v486 = vpop.f32.mrf.mxu0
  %v487 = vadd.f32 0.0, %v486
  %v488 = vpop.f32.mrf.mxu0
  %489 = vdwg.mxu0
  %490 = vrot.lane.b32.xlu0 %v138, 112
  %v491 = vpop.permute.xlu0 %490
  %492 = vrot.lane.b32.xlu0 %v138, 80
  %v493 = vpop.permute.xlu0 %492
  %v494 = vsel %vm147, %v491, 0
  %v496 = vsel %vm147, %v493, 0
  %498 = vmatprep.subr.mxu0 0.0
  %499 = vmatpush1.xpose.msra.mxu0 0.0
  %500 = vmatprep.subr.mxu0 0.0
  %501 = vmatpush1.xpose.msra.mxu0 0.0
  %502 = vmatprep.subr.mxu0 0.0
  %503 = vmatpush1.xpose.msra.mxu0 0.0
  %504 = vmatprep.subr.mxu0 0.0
  %505 = vmatpush1.xpose.msra.mxu0 0.0
  %506 = vmatprep.subr.mxu0 0.0
  %507 = vmatpush1.xpose.msra.mxu0 0.0
  %508 = vmatprep.subr.mxu0 0.0
  %509 = vmatpush1.xpose.msra.mxu0 0.0
  %510 = vmatprep.subr.mxu0 0.0
  %511 = vmatpush1.xpose.msra.mxu0 0.0
  %512 = vmatprep.subr.mxu0 0.0
  %513 = vmatpush1.xpose.msra.mxu0 0.0
  %514 = vmatprep.subr.mxu0 0.0
  %515 = vmatpush1.xpose.msra.mxu0 0.0
  %516 = vmatprep.subr.mxu0 0.0
  %517 = vmatpush1.xpose.msra.mxu0 0.0
  %518 = vmatprep.subr.mxu0 0.0
  %519 = vmatpush1.xpose.msra.mxu0 0.0
  %520 = vmatprep.subr.mxu0 0.0
  %521 = vmatpush1.xpose.msra.mxu0 0.0
  %522 = vmatprep.subr.mxu0 0.0
  %523 = vmatpush1.xpose.msra.mxu0 0.0
  %524 = vmatprep.subr.mxu0 0.0
  %525 = vmatpush1.xpose.msra.mxu0 0.0
  %526 = vmatprep.subr.mxu0 0.0
  %527 = vmatpush1.xpose.msra.mxu0 0.0
  %528 = vmatprep.subr.mxu0 0.0
  %529 = vmatpush1.xpose.msra.mxu0 %v496
  %530 = vmatprep.subr.mxu0 0.0
  %531 = vmatpush2.xpose.msra.mxu0 0.0
  %532 = vmatprep.subr.mxu0 0.0
  %533 = vmatpush2.xpose.msra.mxu0 0.0
  %534 = vmatprep.subr.mxu0 0.0
  %535 = vmatpush2.xpose.msra.mxu0 0.0
  %536 = vmatprep.subr.mxu0 0.0
  %537 = vmatpush2.xpose.msra.mxu0 0.0
  %538 = vmatprep.subr.mxu0 0.0
  %539 = vmatpush2.xpose.msra.mxu0 0.0
  %540 = vmatprep.subr.mxu0 0.0
  %541 = vmatpush2.xpose.msra.mxu0 0.0
  %542 = vmatprep.subr.mxu0 0.0
  %543 = vmatpush2.xpose.msra.mxu0 0.0
  %544 = vmatprep.subr.mxu0 0.0
  %545 = vmatpush2.xpose.msra.mxu0 0.0
  %546 = vmatprep.subr.mxu0 0.0
  %547 = vmatpush2.xpose.msra.mxu0 0.0
  %548 = vmatprep.subr.mxu0 0.0
  %549 = vmatpush2.xpose.msra.mxu0 0.0
  %550 = vmatprep.subr.mxu0 0.0
  %551 = vmatpush2.xpose.msra.mxu0 0.0
  %552 = vmatprep.subr.mxu0 0.0
  %553 = vmatpush2.xpose.msra.mxu0 0.0
  %554 = vmatprep.subr.mxu0 0.0
  %555 = vmatpush2.xpose.msra.mxu0 0.0
  %556 = vmatprep.subr.mxu0 0.0
  %557 = vmatpush2.xpose.msra.mxu0 0.0
  %558 = vmatprep.subr.mxu0 0.0
  %559 = vmatpush2.xpose.msra.mxu0 0.0
  %560 = vmatprep.subr.mxu0 0.0
  %561 = vmatpush2.xpose.msra.mxu0 0.0
  %562 = vmatprep.mubr.f32.mxu0 0.0
  %563 = vmatmul.mubr.f32.gmra.mxu0 %v494
  %v564 = vpop.f32.mrf.mxu0
  %v565 = vadd.f32 0.0, %v564
  %v566 = vpop.f32.mrf.mxu0
  %567 = vdwg.mxu0
  %568 = vrot.lane.b32.xlu0 %v141, 112
  %v569 = vpop.permute.xlu0 %568
  %570 = vrot.lane.b32.xlu0 %v141, 80
  %v571 = vpop.permute.xlu0 %570
  %v572 = vsel %vm147, %v569, 0
  %v574 = vsel %vm147, %v571, 0
  %576 = vmatprep.subr.mxu0 0.0
  %577 = vmatpush1.xpose.msra.mxu0 0.0
  %578 = vmatprep.subr.mxu0 0.0
  %579 = vmatpush1.xpose.msra.mxu0 0.0
  %580 = vmatprep.subr.mxu0 0.0
  %581 = vmatpush1.xpose.msra.mxu0 0.0
  %582 = vmatprep.subr.mxu0 0.0
  %583 = vmatpush1.xpose.msra.mxu0 0.0
  %584 = vmatprep.subr.mxu0 0.0
  %585 = vmatpush1.xpose.msra.mxu0 0.0
  %586 = vmatprep.subr.mxu0 0.0
  %587 = vmatpush1.xpose.msra.mxu0 0.0
  %588 = vmatprep.subr.mxu0 0.0
  %589 = vmatpush1.xpose.msra.mxu0 0.0
  %590 = vmatprep.subr.mxu0 0.0
  %591 = vmatpush1.xpose.msra.mxu0 0.0
  %592 = vmatprep.subr.mxu0 0.0
  %593 = vmatpush1.xpose.msra.mxu0 0.0
  %594 = vmatprep.subr.mxu0 0.0
  %595 = vmatpush1.xpose.msra.mxu0 0.0
  %596 = vmatprep.subr.mxu0 0.0
  %597 = vmatpush1.xpose.msra.mxu0 0.0
  %598 = vmatprep.subr.mxu0 0.0
  %599 = vmatpush1.xpose.msra.mxu0 0.0
  %600 = vmatprep.subr.mxu0 0.0
  %601 = vmatpush1.xpose.msra.mxu0 0.0
  %602 = vmatprep.subr.mxu0 0.0
  %603 = vmatpush1.xpose.msra.mxu0 0.0
  %604 = vmatprep.subr.mxu0 0.0
  %605 = vmatpush1.xpose.msra.mxu0 0.0
  %606 = vmatprep.subr.mxu0 0.0
  %607 = vmatpush1.xpose.msra.mxu0 %v574
  %608 = vmatprep.subr.mxu0 0.0
  %609 = vmatpush2.xpose.msra.mxu0 0.0
  %610 = vmatprep.subr.mxu0 0.0
  %611 = vmatpush2.xpose.msra.mxu0 0.0
  %612 = vmatprep.subr.mxu0 0.0
  %613 = vmatpush2.xpose.msra.mxu0 0.0
  %614 = vmatprep.subr.mxu0 0.0
  %615 = vmatpush2.xpose.msra.mxu0 0.0
  %616 = vmatprep.subr.mxu0 0.0
  %617 = vmatpush2.xpose.msra.mxu0 0.0
  %618 = vmatprep.subr.mxu0 0.0
  %619 = vmatpush2.xpose.msra.mxu0 0.0
  %620 = vmatprep.subr.mxu0 0.0
  %621 = vmatpush2.xpose.msra.mxu0 0.0
  %622 = vmatprep.subr.mxu0 0.0
  %623 = vmatpush2.xpose.msra.mxu0 0.0
  %624 = vmatprep.subr.mxu0 0.0
  %625 = vmatpush2.xpose.msra.mxu0 0.0
  %626 = vmatprep.subr.mxu0 0.0
  %627 = vmatpush2.xpose.msra.mxu0 0.0
  %628 = vmatprep.subr.mxu0 0.0
  %629 = vmatpush2.xpose.msra.mxu0 0.0
  %630 = vmatprep.subr.mxu0 0.0
  %631 = vmatpush2.xpose.msra.mxu0 0.0
  %632 = vmatprep.subr.mxu0 0.0
  %633 = vmatpush2.xpose.msra.mxu0 0.0
  %634 = vmatprep.subr.mxu0 0.0
  %635 = vmatpush2.xpose.msra.mxu0 0.0
  %636 = vmatprep.subr.mxu0 0.0
  %637 = vmatpush2.xpose.msra.mxu0 0.0
  %638 = vmatprep.subr.mxu0 0.0
  %639 = vmatpush2.xpose.msra.mxu0 0.0
  %640 = vmatprep.mubr.f32.mxu0 0.0
  %641 = vmatmul.mubr.f32.gmra.mxu0 %v572
  %v642 = vpop.f32.mrf.mxu0
  %v643 = vadd.f32 0.0, %v642
  %v644 = vpop.f32.mrf.mxu0
  %645 = vdwg.mxu0
  %v646 = vmul.f32 %v565, 0.25
  %v647 = vmul.f32 %v643, 0.25
  %v648 = vadd.f32 %v646, %v306
  %v649 = vadd.f32 %v647, %v310
  %v650 = vsel %vm315, %v648, -inf
  %651 = vmax.xlane.f32.xlu0 %v650
  %v652 = vpop.xlane.xlu0 %651
  %v653 = vsel %vm315, %v649, -inf
  %654 = vmax.xlane.f32.xlu0 %v653
  %v655 = vpop.xlane.xlu0 %654
  %v656 = vsub.f32 %v648, %v652
  %v657 = vsub.f32 %v649, %v655
  %v658 = vmul.f32 %v656, 1.442695
  %v659 = vpow.pop %v658
  %v660 = vmul.f32 %v657, 1.442695
  %v661 = vpow.pop %v660
  %v662 = vsel %vm315, %v659, 0.0
  %663 = vadd.xlane.f32.xlu0 %v662
  %v664 = vpop.xlane.xlu0 %663
  %v665 = vsel %vm315, %v661, 0.0
  %666 = vadd.xlane.f32.xlu0 %v665
  %v667 = vpop.xlane.xlu0 %666
  %v668 = vrcp.pop %v664
  %v669 = vrcp.pop %v667
  %v670 = vmul.f32 %v659, %v668
  %v671 = vmul.f32 %v661, %v669
  %672 = vrot.lane.b32.xlu0 %v138, 48
  %v673 = vpop.permute.xlu0 %672
  %v676 = vsel %vm315, %v670, 0
  %678 = vmatprep.subr.mxu0 0.0
  %679 = vmatpush1.msra.mxu0 0.0
  %680 = vmatprep.subr.mxu0 0.0
  %681 = vmatpush1.msra.mxu0 0.0
  %682 = vmatprep.subr.mxu0 0.0
  %683 = vmatpush1.msra.mxu0 0.0
  %684 = vmatprep.subr.mxu0 0.0
  %685 = vmatpush1.msra.mxu0 0.0
  %686 = vmatprep.subr.mxu0 0.0
  %687 = vmatpush1.msra.mxu0 0.0
  %688 = vmatprep.subr.mxu0 0.0
  %689 = vmatpush1.msra.mxu0 0.0
  %690 = vmatprep.subr.mxu0 0.0
  %691 = vmatpush1.msra.mxu0 0.0
  %692 = vmatprep.subr.mxu0 0.0
  %693 = vmatpush1.msra.mxu0 0.0
  %694 = vmatprep.subr.mxu0 0.0
  %695 = vmatpush1.msra.mxu0 0.0
  %696 = vmatprep.subr.mxu0 0.0
  %697 = vmatpush1.msra.mxu0 0.0
  %698 = vmatprep.subr.mxu0 0.0
  %699 = vmatpush1.msra.mxu0 0.0
  %700 = vmatprep.subr.mxu0 0.0
  %701 = vmatpush1.msra.mxu0 0.0
  %702 = vmatprep.subr.mxu0 0.0
  %703 = vmatpush1.msra.mxu0 0.0
  %704 = vmatprep.subr.mxu0 0.0
  %705 = vmatpush1.msra.mxu0 0.0
  %706 = vmatprep.subr.mxu0 0.0
  %707 = vmatpush1.msra.mxu0 0.0
  %708 = vmatprep.subr.mxu0 0.0
  %709 = vmatpush1.msra.mxu0 %v673
  %710 = vmatprep.subr.mxu0 0.0
  %711 = vmatpush2.msra.mxu0 0.0
  %712 = vmatprep.subr.mxu0 0.0
  %713 = vmatpush2.msra.mxu0 0.0
  %714 = vmatprep.subr.mxu0 0.0
  %715 = vmatpush2.msra.mxu0 0.0
  %716 = vmatprep.subr.mxu0 0.0
  %717 = vmatpush2.msra.mxu0 0.0
  %718 = vmatprep.subr.mxu0 0.0
  %719 = vmatpush2.msra.mxu0 0.0
  %720 = vmatprep.subr.mxu0 0.0
  %721 = vmatpush2.msra.mxu0 0.0
  %722 = vmatprep.subr.mxu0 0.0
  %723 = vmatpush2.msra.mxu0 0.0
  %724 = vmatprep.subr.mxu0 0.0
  %725 = vmatpush2.msra.mxu0 0.0
  %726 = vmatprep.subr.mxu0 0.0
  %727 = vmatpush2.msra.mxu0 0.0
  %728 = vmatprep.subr.mxu0 0.0
  %729 = vmatpush2.msra.mxu0 0.0
  %730 = vmatprep.subr.mxu0 0.0
  %731 = vmatpush2.msra.mxu0 0.0
  %732 = vmatprep.subr.mxu0 0.0
  %733 = vmatpush2.msra.mxu0 0.0
  %734 = vmatprep.subr.mxu0 0.0
  %735 = vmatpush2.msra.mxu0 0.0
  %736 = vmatprep.subr.mxu0 0.0
  %737 = vmatpush2.msra.mxu0 0.0
  %738 = vmatprep.subr.mxu0 0.0
  %739 = vmatpush2.msra.mxu0 0.0
  %740 = vmatprep.subr.mxu0 0.0
  %741 = vmatpush2.msra.mxu0 0.0
  %742 = vmatprep.mubr.f32.mxu0 0.0
  %743 = vmatmul.mubr.f32.gmra.mxu0 %v676
  %v744 = vpop.f32.mrf.mxu0
  %v745 = vadd.f32 0.0, %v744
  %v746 = vpop.f32.mrf.mxu0
  %747 = vdwg.mxu0
  %748 = vrot.lane.b32.xlu0 %v141, 48
  %v749 = vpop.permute.xlu0 %748
  %v752 = vsel %vm315, %v671, 0
  %754 = vmatprep.subr.mxu0 0.0
  %755 = vmatpush1.msra.mxu0 0.0
  %756 = vmatprep.subr.mxu0 0.0
  %757 = vmatpush1.msra.mxu0 0.0
  %758 = vmatprep.subr.mxu0 0.0
  %759 = vmatpush1.msra.mxu0 0.0
  %760 = vmatprep.subr.mxu0 0.0
  %761 = vmatpush1.msra.mxu0 0.0
  %762 = vmatprep.subr.mxu0 0.0
  %763 = vmatpush1.msra.mxu0 0.0
  %764 = vmatprep.subr.mxu0 0.0
  %765 = vmatpush1.msra.mxu0 0.0
  %766 = vmatprep.subr.mxu0 0.0
  %767 = vmatpush1.msra.mxu0 0.0
  %768 = vmatprep.subr.mxu0 0.0
  %769 = vmatpush1.msra.mxu0 0.0
  %770 = vmatprep.subr.mxu0 0.0
  %771 = vmatpush1.msra.mxu0 0.0
  %772 = vmatprep.subr.mxu0 0.0
  %773 = vmatpush1.msra.mxu0 0.0
  %774 = vmatprep.subr.mxu0 0.0
  %775 = vmatpush1.msra.mxu0 0.0
  %776 = vmatprep.subr.mxu0 0.0
  %777 = vmatpush1.msra.mxu0 0.0
  %778 = vmatprep.subr.mxu0 0.0
  %779 = vmatpush1.msra.mxu0 0.0
  %780 = vmatprep.subr.mxu0 0.0
  %781 = vmatpush1.msra.mxu0 0.0
  %782 = vmatprep.subr.mxu0 0.0
  %783 = vmatpush1.msra.mxu0 0.0
  %784 = vmatprep.subr.mxu0 0.0
  %785 = vmatpush1.msra.mxu0 %v749
  %786 = vmatprep.subr.mxu0 0.0
  %787 = vmatpush2.msra.mxu0 0.0
  %788 = vmatprep.subr.mxu0 0.0
  %789 = vmatpush2.msra.mxu0 0.0
  %790 = vmatprep.subr.mxu0 0.0
  %791 = vmatpush2.msra.mxu0 0.0
  %792 = vmatprep.subr.mxu0 0.0
  %793 = vmatpush2.msra.mxu0 0.0
  %794 = vmatprep.subr.mxu0 0.0
  %795 = vmatpush2.msra.mxu0 0.0
  %796 = vmatprep.subr.mxu0 0.0
  %797 = vmatpush2.msra.mxu0 0.0
  %798 = vmatprep.subr.mxu0 0.0
  %799 = vmatpush2.msra.mxu0 0.0
  %800 = vmatprep.subr.mxu0 0.0
  %801 = vmatpush2.msra.mxu0 0.0
  %802 = vmatprep.subr.mxu0 0.0
  %803 = vmatpush2.msra.mxu0 0.0
  %804 = vmatprep.subr.mxu0 0.0
  %805 = vmatpush2.msra.mxu0 0.0
  %806 = vmatprep.subr.mxu0 0.0
  %807 = vmatpush2.msra.mxu0 0.0
  %808 = vmatprep.subr.mxu0 0.0
  %809 = vmatpush2.msra.mxu0 0.0
  %810 = vmatprep.subr.mxu0 0.0
  %811 = vmatpush2.msra.mxu0 0.0
  %812 = vmatprep.subr.mxu0 0.0
  %813 = vmatpush2.msra.mxu0 0.0
  %814 = vmatprep.subr.mxu0 0.0
  %815 = vmatpush2.msra.mxu0 0.0
  %816 = vmatprep.subr.mxu0 0.0
  %817 = vmatpush2.msra.mxu0 0.0
  %818 = vmatprep.mubr.f32.mxu0 0.0
  %819 = vmatmul.mubr.f32.gmra.mxu0 %v752
  %v820 = vpop.f32.mrf.mxu0
  %v821 = vadd.f32 0.0, %v820
  %v822 = vpop.f32.mrf.mxu0
  %823 = vdwg.mxu0
  %826 = vrot.lane.b32.xlu0 %v745, 16
  %v827 = vpop.permute.xlu0 %826
  %828 = vrot.lane.b32.xlu0 %v821, 16
  %v829 = vpop.permute.xlu0 %828
  %v832 = vsel %vm147, %v411, %v827
  %v833 = vsel %vm147, %v487, %v829
  %v834 = vpack.c.bf16 %v833, %v832
  %v835 = vld [vmem:[%s5] sm:$0xf]
  %v836 = vld [vmem:[%s5 + $0x4] sm:$0xf]
  %v837 = vld [vmem:[%s5 + $0x8] sm:$0xf]
  %v838 = vld [vmem:[%s5 + $0xc] sm:$0xf]
  %v839 = vlaneseq
  %v840 = vshrl.u32 %v839, 7
  %v841 = vsub.s32 1, %v840
  %v842 = vrot.slane %v78, %v841
  %v847 = vunpack.c.l.b16 %v835
  %v848 = vunpack.c.l.b16 %v836
  %v849 = vunpack.c.l.b16 %v837
  %v850 = vunpack.c.l.b16 %v838
  %v851 = vpack.c.b16 %v848, %v847
  %v852 = vpack.c.b16 %v850, %v849
  %v856 = vsel %vm36, %v834, 0
  %858 = vmatprep.subr.bf16.mxu0 0
  %859 = vmatpush1.bf16.msra.mxu0 0
  %860 = vmatprep.subr.bf16.mxu0 0
  %861 = vmatpush1.bf16.msra.mxu0 0
  %862 = vmatprep.subr.bf16.mxu0 0
  %863 = vmatpush1.bf16.msra.mxu0 0
  %864 = vmatprep.subr.bf16.mxu0 0
  %865 = vmatpush1.bf16.msra.mxu0 0
  %866 = vmatprep.subr.bf16.mxu0 0
  %867 = vmatpush1.bf16.msra.mxu0 0
  %868 = vmatprep.subr.bf16.mxu0 0
  %869 = vmatpush1.bf16.msra.mxu0 0
  %870 = vmatprep.subr.bf16.mxu0 0
  %871 = vmatpush1.bf16.msra.mxu0 %v852
  %872 = vmatprep.subr.bf16.mxu0 0
  %873 = vmatpush1.bf16.msra.mxu0 %v851
  %874 = vmatprep.subr.bf16.mxu0 0
  %875 = vmatpush2.bf16.msra.mxu0 0
  %876 = vmatprep.subr.bf16.mxu0 0
  %877 = vmatpush2.bf16.msra.mxu0 0
  %878 = vmatprep.subr.bf16.mxu0 0
  %879 = vmatpush2.bf16.msra.mxu0 0
  %880 = vmatprep.subr.bf16.mxu0 0
  %881 = vmatpush2.bf16.msra.mxu0 0
  %882 = vmatprep.subr.bf16.mxu0 0
  %883 = vmatpush2.bf16.msra.mxu0 0
  %884 = vmatprep.subr.bf16.mxu0 0
  %885 = vmatpush2.bf16.msra.mxu0 0
  %886 = vmatprep.subr.bf16.mxu0 0
  %887 = vmatpush2.bf16.msra.mxu0 0
  %888 = vmatprep.subr.bf16.mxu0 0
  %889 = vmatpush2.bf16.msra.mxu0 0
  %890 = vmatprep.mubr.bf16.mxu0 0
  %891 = vmatmul.mubr.bf16.gmra.mxu0 %v856
  %v892 = vpop.f32.mrf.mxu0
  %v893 = vadd.f32 %v842, %v892
  %v894 = vpop.f32.mrf.mxu0
  %v895 = vpop.f32.mrf.mxu0
  %v896 = vadd.f32 %v842, %v895
  %v897 = vpop.f32.mrf.mxu0
  %898 = vdwg.mxu0
  %v899 = vadd.f32 %v893, %v74
  %v900 = vadd.f32 %v896, %v75
  %v901 = vsel %vm36, %v899, 0.0
  %902 = vadd.xlane.f32.xlu0 %v901
  %v903 = vpop.xlane.xlu0 %902
  %v904 = vsel %vm36, %v900, 0.0
  %905 = vadd.xlane.f32.xlu0 %v904
  %v906 = vpop.xlane.xlu0 %905
  %v907 = vmul.f32 %v903, %v43
  %v908 = vmul.f32 %v906, %v43
  %v909 = vsub.f32 %v899, %v907
  %v910 = vsub.f32 %v900, %v908
  %v911 = vmul.f32 %v909, %v909
  %v912 = vmul.f32 %v910, %v910
  %v913 = vsel %vm36, %v911, 0.0
  %914 = vadd.xlane.f32.xlu0 %v913
  %v915 = vpop.xlane.xlu0 %914
  %v916 = vsel %vm36, %v912, 0.0
  %917 = vadd.xlane.f32.xlu0 %v916
  %v918 = vpop.xlane.xlu0 %917
  %v919 = vmul.f32 %v915, %v43
  %v920 = vmul.f32 %v918, %v43
  %v921 = vadd.f32 %v919, 1e-06
  %v922 = vadd.f32 %v920, 1e-06
  %v923 = vrsqrt.pop %v921
  %v924 = vrsqrt.pop %v922
  %v925 = vmul.f32 %v909, %v923
  %v926 = vmul.f32 %v910, %v924
  %v927 = vlaneseq
  %v928 = vshrl.u32 %v927, 7
  %v929 = vsub.s32 2, %v928
  %v930 = vrot.slane %v78, %v929
  %v931 = vmul.f32 %v925, %v930
  %v932 = vmul.f32 %v926, %v930
  %v933 = vlaneseq
  %v934 = vshrl.u32 %v933, 7
  %v935 = vsub.s32 3, %v934
  %v936 = vrot.slane %v78, %v935
  %v937 = vadd.f32 %v931, %v936
  %v938 = vadd.f32 %v932, %v936
  %v939 = vpack.c.bf16 %v938, %v937
  %v940 = vld [vmem:[%s6] sm:$0xf]
  %v941 = vld [vmem:[%s6 + $0x4] sm:$0xf]
  %v942 = vld [vmem:[%s6 + $0x8] sm:$0xf]
  %v943 = vld [vmem:[%s6 + $0xc] sm:$0xf]
  %v944 = vlaneseq
  %v945 = vshrl.u32 %v944, 7
  %v946 = vsub.s32 4, %v945
  %v947 = vrot.slane %v78, %v946
  %v952 = vunpack.c.l.b16 %v940
  %v953 = vunpack.c.l.b16 %v941
  %v954 = vunpack.c.l.b16 %v942
  %v955 = vunpack.c.l.b16 %v943
  %v956 = vpack.c.b16 %v953, %v952
  %v957 = vpack.c.b16 %v955, %v954
  %v961 = vsel %vm36, %v939, 0
  %963 = vmatprep.subr.bf16.mxu0 0
  %964 = vmatpush1.bf16.msra.mxu0 0
  %965 = vmatprep.subr.bf16.mxu0 0
  %966 = vmatpush1.bf16.msra.mxu0 0
  %967 = vmatprep.subr.bf16.mxu0 0
  %968 = vmatpush1.bf16.msra.mxu0 0
  %969 = vmatprep.subr.bf16.mxu0 0
  %970 = vmatpush1.bf16.msra.mxu0 0
  %971 = vmatprep.subr.bf16.mxu0 0
  %972 = vmatpush1.bf16.msra.mxu0 0
  %973 = vmatprep.subr.bf16.mxu0 0
  %974 = vmatpush1.bf16.msra.mxu0 0
  %975 = vmatprep.subr.bf16.mxu0 0
  %976 = vmatpush1.bf16.msra.mxu0 %v957
  %977 = vmatprep.subr.bf16.mxu0 0
  %978 = vmatpush1.bf16.msra.mxu0 %v956
  %979 = vmatprep.subr.bf16.mxu0 0
  %980 = vmatpush2.bf16.msra.mxu0 0
  %981 = vmatprep.subr.bf16.mxu0 0
  %982 = vmatpush2.bf16.msra.mxu0 0
  %983 = vmatprep.subr.bf16.mxu0 0
  %984 = vmatpush2.bf16.msra.mxu0 0
  %985 = vmatprep.subr.bf16.mxu0 0
  %986 = vmatpush2.bf16.msra.mxu0 0
  %987 = vmatprep.subr.bf16.mxu0 0
  %988 = vmatpush2.bf16.msra.mxu0 0
  %989 = vmatprep.subr.bf16.mxu0 0
  %990 = vmatpush2.bf16.msra.mxu0 0
  %991 = vmatprep.subr.bf16.mxu0 0
  %992 = vmatpush2.bf16.msra.mxu0 0
  %993 = vmatprep.subr.bf16.mxu0 0
  %994 = vmatpush2.bf16.msra.mxu0 0
  %995 = vmatprep.mubr.bf16.mxu0 0
  %996 = vmatmul.mubr.bf16.gmra.mxu0 %v961
  %v997 = vpop.f32.mrf.mxu0
  %v998 = vadd.f32 %v947, %v997
  %v999 = vpop.f32.mrf.mxu0
  %v1000 = vpop.f32.mrf.mxu0
  %v1001 = vadd.f32 %v947, %v1000
  %v1002 = vpop.f32.mrf.mxu0
  %1003 = vdwg.mxu0
  %v1004 = vmul.f32 %v998, 0.5
  %v1005 = vmul.f32 %v1001, 0.5
  %v1006 = vmul.f32 %v998, 0.044715
  %v1007 = vmul.f32 %v1001, 0.044715
  %v1008 = vmul.f32 %v1006, %v998
  %v1009 = vmul.f32 %v1007, %v1001
  %v1010 = vmul.f32 %v1008, %v998
  %v1011 = vmul.f32 %v1009, %v1001
  %v1012 = vadd.f32 %v998, %v1010
  %v1013 = vadd.f32 %v1001, %v1011
  %v1014 = vmul.f32 %v1012, 0.7978846
  %v1015 = vmul.f32 %v1013, 0.7978846
  %v1016 = vtanh.pop %v1014
  %v1017 = vtanh.pop %v1015
  %v1018 = vadd.f32 %v1016, 1.0
  %v1019 = vadd.f32 %v1017, 1.0
  %v1020 = vmul.f32 %v1004, %v1018
  %v1021 = vmul.f32 %v1005, %v1019
  %v1022 = vpack.c.bf16 %v1021, %v1020
  %v1023 = vld [vmem:[%s7] sm:$0xf]
  %v1024 = vld [vmem:[%s7 + $0x4] sm:$0xf]
  %v1025 = vld [vmem:[%s7 + $0x8] sm:$0xf]
  %v1026 = vld [vmem:[%s7 + $0xc] sm:$0xf]
  %v1027 = vld [vmem:[%s7 + $0x10] sm:$0xf]
  %v1028 = vld [vmem:[%s7 + $0x14] sm:$0xf]
  %v1029 = vld [vmem:[%s7 + $0x18] sm:$0xf]
  %v1030 = vld [vmem:[%s7 + $0x1c] sm:$0xf]
  %v1031 = vlaneseq
  %v1032 = vshrl.u32 %v1031, 7
  %v1033 = vsub.s32 5, %v1032
  %v1034 = vrot.slane %v78, %v1033
  %v1043 = vunpack.c.l.b16 %v1023
  %v1044 = vunpack.c.l.b16 %v1024
  %v1045 = vunpack.c.l.b16 %v1025
  %v1046 = vunpack.c.l.b16 %v1026
  %v1047 = vunpack.c.l.b16 %v1027
  %v1048 = vunpack.c.l.b16 %v1028
  %v1049 = vunpack.c.l.b16 %v1029
  %v1050 = vunpack.c.l.b16 %v1030
  %v1051 = vpack.c.b16 %v1044, %v1043
  %v1052 = vpack.c.b16 %v1046, %v1045
  %v1053 = vpack.c.b16 %v1048, %v1047
  %v1054 = vpack.c.b16 %v1050, %v1049
  %vm1059 = vcmask 523264
  %v1061 = vsel %vm1059, %v1022, 0
  %1063 = vmatprep.subr.bf16.mxu0 0
  %1064 = vmatpush1.bf16.msra.mxu0 0
  %1065 = vmatprep.subr.bf16.mxu0 0
  %1066 = vmatpush1.bf16.msra.mxu0 0
  %1067 = vmatprep.subr.bf16.mxu0 0
  %1068 = vmatpush1.bf16.msra.mxu0 0
  %1069 = vmatprep.subr.bf16.mxu0 0
  %1070 = vmatpush1.bf16.msra.mxu0 0
  %1071 = vmatprep.subr.bf16.mxu0 0
  %1072 = vmatpush1.bf16.msra.mxu0 %v1054
  %1073 = vmatprep.subr.bf16.mxu0 0
  %1074 = vmatpush1.bf16.msra.mxu0 %v1053
  %1075 = vmatprep.subr.bf16.mxu0 0
  %1076 = vmatpush1.bf16.msra.mxu0 %v1052
  %1077 = vmatprep.subr.bf16.mxu0 0
  %1078 = vmatpush1.bf16.msra.mxu0 %v1051
  %1079 = vmatprep.subr.bf16.mxu0 0
  %1080 = vmatpush2.bf16.msra.mxu0 0
  %1081 = vmatprep.subr.bf16.mxu0 0
  %1082 = vmatpush2.bf16.msra.mxu0 0
  %1083 = vmatprep.subr.bf16.mxu0 0
  %1084 = vmatpush2.bf16.msra.mxu0 0
  %1085 = vmatprep.subr.bf16.mxu0 0
  %1086 = vmatpush2.bf16.msra.mxu0 0
  %1087 = vmatprep.subr.bf16.mxu0 0
  %1088 = vmatpush2.bf16.msra.mxu0 0
  %1089 = vmatprep.subr.bf16.mxu0 0
  %1090 = vmatpush2.bf16.msra.mxu0 0
  %1091 = vmatprep.subr.bf16.mxu0 0
  %1092 = vmatpush2.bf16.msra.mxu0 0
  %1093 = vmatprep.subr.bf16.mxu0 0
  %1094 = vmatpush2.bf16.msra.mxu0 0
  %1095 = vmatprep.mubr.bf16.mxu0 0
  %1096 = vmatmul.mubr.bf16.gmra.mxu0 %v1061
  %v1097 = vpop.f32.mrf.mxu0
  %v1098 = vadd.f32 %v1034, %v1097
  %v1099 = vpop.f32.mrf.mxu0
  %v1100 = vpop.f32.mrf.mxu0
  %v1101 = vadd.f32 %v1034, %v1100
  %v1102 = vpop.f32.mrf.mxu0
  %1103 = vdwg.mxu0
  %v1104 = vadd.f32 %v1098, %v937
  %v1105 = vadd.f32 %v1101, %v938
  %v1106 = vsel %vm36, %v1104, 0.0
  %1107 = vadd.xlane.f32.xlu0 %v1106
  %v1108 = vpop.xlane.xlu0 %1107
  %v1109 = vsel %vm36, %v1105, 0.0
  %1110 = vadd.xlane.f32.xlu0 %v1109
  %v1111 = vpop.xlane.xlu0 %1110
  %v1112 = vmul.f32 %v1108, %v43
  %v1113 = vmul.f32 %v1111, %v43
  %v1114 = vsub.f32 %v1104, %v1112
  %v1115 = vsub.f32 %v1105, %v1113
  %v1116 = vmul.f32 %v1114, %v1114
  %v1117 = vmul.f32 %v1115, %v1115
  %v1118 = vsel %vm36, %v1116, 0.0
  %1119 = vadd.xlane.f32.xlu0 %v1118
  %v1120 = vpop.xlane.xlu0 %1119
  %v1121 = vsel %vm36, %v1117, 0.0
  %1122 = vadd.xlane.f32.xlu0 %v1121
  %v1123 = vpop.xlane.xlu0 %1122
  %v1124 = vmul.f32 %v1120, %v43
  %v1125 = vmul.f32 %v1123, %v43
  %v1126 = vadd.f32 %v1124, 1e-06
  %v1127 = vadd.f32 %v1125, 1e-06
  %v1128 = vrsqrt.pop %v1126
  %v1129 = vrsqrt.pop %v1127
  %v1130 = vmul.f32 %v1114, %v1128
  %v1131 = vmul.f32 %v1115, %v1129
  %v1132 = vlaneseq
  %v1133 = vshrl.u32 %v1132, 7
  %v1134 = vsub.s32 6, %v1133
  %v1135 = vrot.slane %v78, %v1134
  %v1136 = vmul.f32 %v1130, %v1135
  %v1137 = vmul.f32 %v1131, %v1135
  %v1138 = vlaneseq
  %v1139 = vshrl.u32 %v1138, 7
  %v1140 = vsub.s32 7, %v1139
  %v1141 = vrot.slane %v78, %v1140
  %v1142 = vadd.f32 %v1136, %v1141
  %v1143 = vadd.f32 %v1137, %v1141
  %s1144 = scalar_lea.vmem %s8, 8
  %v1145 = vld [vmem:[%s1144] sm:$0xff]
  %v1146 = vpack.c.bf16 %v1143, %v1142
  %s1147 = scalar_lea.vmem %s4, 16
  %v1148 = vld [vmem:[%s1147] sm:$0xf]
  %v1149 = vld [vmem:[%s1147 + $0x4] sm:$0xf]
  %v1150 = vld [vmem:[%s1147 + $0x8] sm:$0xf]
  %v1151 = vld [vmem:[%s1147 + $0xc] sm:$0xf]
  %v1152 = vlaneseq
  %v1153 = vshrl.u32 %v1152, 7
  %v1154 = vsub.s32 0, %v1153
  %v1155 = vrot.slane %v1145, %v1154
  %v1160 = vunpack.c.l.b16 %v1148
  %v1161 = vunpack.c.l.b16 %v1149
  %v1162 = vunpack.c.l.b16 %v1150
  %v1163 = vunpack.c.l.b16 %v1151
  %v1164 = vpack.c.b16 %v1161, %v1160
  %v1165 = vpack.c.b16 %v1163, %v1162
  %v1169 = vsel %vm36, %v1146, 0
  %1171 = vmatprep.subr.bf16.mxu0 0
  %1172 = vmatpush1.bf16.msra.mxu0 0
  %1173 = vmatprep.subr.bf16.mxu0 0
  %1174 = vmatpush1.bf16.msra.mxu0 0
  %1175 = vmatprep.subr.bf16.mxu0 0
  %1176 = vmatpush1.bf16.msra.mxu0 0
  %1177 = vmatprep.subr.bf16.mxu0 0
  %1178 = vmatpush1.bf16.msra.mxu0 0
  %1179 = vmatprep.subr.bf16.mxu0 0
  %1180 = vmatpush1.bf16.msra.mxu0 0
  %1181 = vmatprep.subr.bf16.mxu0 0
  %1182 = vmatpush1.bf16.msra.mxu0 0
  %1183 = vmatprep.subr.bf16.mxu0 0
  %1184 = vmatpush1.bf16.msra.mxu0 %v1165
  %1185 = vmatprep.subr.bf16.mxu0 0
  %1186 = vmatpush1.bf16.msra.mxu0 %v1164
  %1187 = vmatprep.subr.bf16.mxu0 0
  %1188 = vmatpush2.bf16.msra.mxu0 0
  %1189 = vmatprep.subr.bf16.mxu0 0
  %1190 = vmatpush2.bf16.msra.mxu0 0
  %1191 = vmatprep.subr.bf16.mxu0 0
  %1192 = vmatpush2.bf16.msra.mxu0 0
  %1193 = vmatprep.subr.bf16.mxu0 0
  %1194 = vmatpush2.bf16.msra.mxu0 0
  %1195 = vmatprep.subr.bf16.mxu0 0
  %1196 = vmatpush2.bf16.msra.mxu0 0
  %1197 = vmatprep.subr.bf16.mxu0 0
  %1198 = vmatpush2.bf16.msra.mxu0 0
  %1199 = vmatprep.subr.bf16.mxu0 0
  %1200 = vmatpush2.bf16.msra.mxu0 0
  %1201 = vmatprep.subr.bf16.mxu0 0
  %1202 = vmatpush2.bf16.msra.mxu0 0
  %1203 = vmatprep.mubr.bf16.mxu0 0
  %1204 = vmatmul.mubr.bf16.gmra.mxu0 %v1169
  %v1205 = vpop.f32.mrf.mxu0
  %v1206 = vadd.f32 %v1155, %v1205
  %v1207 = vpop.f32.mrf.mxu0
  %v1208 = vpop.f32.mrf.mxu0
  %v1209 = vadd.f32 %v1155, %v1208
  %v1210 = vpop.f32.mrf.mxu0
  %1211 = vdwg.mxu0
  %1213 = vrot.lane.b32.xlu0 %v1206, 96
  %v1214 = vpop.permute.xlu0 %1213
  %v1215 = vsel %vm147, %v1206, 0
  %v1217 = vsel %vm147, %v1214, 0
  %1219 = vmatprep.subr.mxu0 0.0
  %1220 = vmatpush1.xpose.msra.mxu0 0.0
  %1221 = vmatprep.subr.mxu0 0.0
  %1222 = vmatpush1.xpose.msra.mxu0 0.0
  %1223 = vmatprep.subr.mxu0 0.0
  %1224 = vmatpush1.xpose.msra.mxu0 0.0
  %1225 = vmatprep.subr.mxu0 0.0
  %1226 = vmatpush1.xpose.msra.mxu0 0.0
  %1227 = vmatprep.subr.mxu0 0.0
  %1228 = vmatpush1.xpose.msra.mxu0 0.0
  %1229 = vmatprep.subr.mxu0 0.0
  %1230 = vmatpush1.xpose.msra.mxu0 0.0
  %1231 = vmatprep.subr.mxu0 0.0
  %1232 = vmatpush1.xpose.msra.mxu0 0.0
  %1233 = vmatprep.subr.mxu0 0.0
  %1234 = vmatpush1.xpose.msra.mxu0 0.0
  %1235 = vmatprep.subr.mxu0 0.0
  %1236 = vmatpush1.xpose.msra.mxu0 0.0
  %1237 = vmatprep.subr.mxu0 0.0
  %1238 = vmatpush1.xpose.msra.mxu0 0.0
  %1239 = vmatprep.subr.mxu0 0.0
  %1240 = vmatpush1.xpose.msra.mxu0 0.0
  %1241 = vmatprep.subr.mxu0 0.0
  %1242 = vmatpush1.xpose.msra.mxu0 0.0
  %1243 = vmatprep.subr.mxu0 0.0
  %1244 = vmatpush1.xpose.msra.mxu0 0.0
  %1245 = vmatprep.subr.mxu0 0.0
  %1246 = vmatpush1.xpose.msra.mxu0 0.0
  %1247 = vmatprep.subr.mxu0 0.0
  %1248 = vmatpush1.xpose.msra.mxu0 0.0
  %1249 = vmatprep.subr.mxu0 0.0
  %1250 = vmatpush1.xpose.msra.mxu0 %v1217
  %1251 = vmatprep.subr.mxu0 0.0
  %1252 = vmatpush2.xpose.msra.mxu0 0.0
  %1253 = vmatprep.subr.mxu0 0.0
  %1254 = vmatpush2.xpose.msra.mxu0 0.0
  %1255 = vmatprep.subr.mxu0 0.0
  %1256 = vmatpush2.xpose.msra.mxu0 0.0
  %1257 = vmatprep.subr.mxu0 0.0
  %1258 = vmatpush2.xpose.msra.mxu0 0.0
  %1259 = vmatprep.subr.mxu0 0.0
  %1260 = vmatpush2.xpose.msra.mxu0 0.0
  %1261 = vmatprep.subr.mxu0 0.0
  %1262 = vmatpush2.xpose.msra.mxu0 0.0
  %1263 = vmatprep.subr.mxu0 0.0
  %1264 = vmatpush2.xpose.msra.mxu0 0.0
  %1265 = vmatprep.subr.mxu0 0.0
  %1266 = vmatpush2.xpose.msra.mxu0 0.0
  %1267 = vmatprep.subr.mxu0 0.0
  %1268 = vmatpush2.xpose.msra.mxu0 0.0
  %1269 = vmatprep.subr.mxu0 0.0
  %1270 = vmatpush2.xpose.msra.mxu0 0.0
  %1271 = vmatprep.subr.mxu0 0.0
  %1272 = vmatpush2.xpose.msra.mxu0 0.0
  %1273 = vmatprep.subr.mxu0 0.0
  %1274 = vmatpush2.xpose.msra.mxu0 0.0
  %1275 = vmatprep.subr.mxu0 0.0
  %1276 = vmatpush2.xpose.msra.mxu0 0.0
  %1277 = vmatprep.subr.mxu0 0.0
  %1278 = vmatpush2.xpose.msra.mxu0 0.0
  %1279 = vmatprep.subr.mxu0 0.0
  %1280 = vmatpush2.xpose.msra.mxu0 0.0
  %1281 = vmatprep.subr.mxu0 0.0
  %1282 = vmatpush2.xpose.msra.mxu0 0.0
  %1283 = vmatprep.mubr.f32.mxu0 0.0
  %1284 = vmatmul.mubr.f32.gmra.mxu0 %v1215
  %v1285 = vpop.f32.mrf.mxu0
  %v1286 = vadd.f32 0.0, %v1285
  %v1287 = vpop.f32.mrf.mxu0
  %1288 = vdwg.mxu0
  %1290 = vrot.lane.b32.xlu0 %v1209, 96
  %v1291 = vpop.permute.xlu0 %1290
  %v1292 = vsel %vm147, %v1209, 0
  %v1294 = vsel %vm147, %v1291, 0
  %1296 = vmatprep.subr.mxu0 0.0
  %1297 = vmatpush1.xpose.msra.mxu0 0.0
  %1298 = vmatprep.subr.mxu0 0.0
  %1299 = vmatpush1.xpose.msra.mxu0 0.0
  %1300 = vmatprep.subr.mxu0 0.0
  %1301 = vmatpush1.xpose.msra.mxu0 0.0
  %1302 = vmatprep.subr.mxu0 0.0
  %1303 = vmatpush1.xpose.msra.mxu0 0.0
  %1304 = vmatprep.subr.mxu0 0.0
  %1305 = vmatpush1.xpose.msra.mxu0 0.0
  %1306 = vmatprep.subr.mxu0 0.0
  %1307 = vmatpush1.xpose.msra.mxu0 0.0
  %1308 = vmatprep.subr.mxu0 0.0
  %1309 = vmatpush1.xpose.msra.mxu0 0.0
  %1310 = vmatprep.subr.mxu0 0.0
  %1311 = vmatpush1.xpose.msra.mxu0 0.0
  %1312 = vmatprep.subr.mxu0 0.0
  %1313 = vmatpush1.xpose.msra.mxu0 0.0
  %1314 = vmatprep.subr.mxu0 0.0
  %1315 = vmatpush1.xpose.msra.mxu0 0.0
  %1316 = vmatprep.subr.mxu0 0.0
  %1317 = vmatpush1.xpose.msra.mxu0 0.0
  %1318 = vmatprep.subr.mxu0 0.0
  %1319 = vmatpush1.xpose.msra.mxu0 0.0
  %1320 = vmatprep.subr.mxu0 0.0
  %1321 = vmatpush1.xpose.msra.mxu0 0.0
  %1322 = vmatprep.subr.mxu0 0.0
  %1323 = vmatpush1.xpose.msra.mxu0 0.0
  %1324 = vmatprep.subr.mxu0 0.0
  %1325 = vmatpush1.xpose.msra.mxu0 0.0
  %1326 = vmatprep.subr.mxu0 0.0
  %1327 = vmatpush1.xpose.msra.mxu0 %v1294
  %1328 = vmatprep.subr.mxu0 0.0
  %1329 = vmatpush2.xpose.msra.mxu0 0.0
  %1330 = vmatprep.subr.mxu0 0.0
  %1331 = vmatpush2.xpose.msra.mxu0 0.0
  %1332 = vmatprep.subr.mxu0 0.0
  %1333 = vmatpush2.xpose.msra.mxu0 0.0
  %1334 = vmatprep.subr.mxu0 0.0
  %1335 = vmatpush2.xpose.msra.mxu0 0.0
  %1336 = vmatprep.subr.mxu0 0.0
  %1337 = vmatpush2.xpose.msra.mxu0 0.0
  %1338 = vmatprep.subr.mxu0 0.0
  %1339 = vmatpush2.xpose.msra.mxu0 0.0
  %1340 = vmatprep.subr.mxu0 0.0
  %1341 = vmatpush2.xpose.msra.mxu0 0.0
  %1342 = vmatprep.subr.mxu0 0.0
  %1343 = vmatpush2.xpose.msra.mxu0 0.0
  %1344 = vmatprep.subr.mxu0 0.0
  %1345 = vmatpush2.xpose.msra.mxu0 0.0
  %1346 = vmatprep.subr.mxu0 0.0
  %1347 = vmatpush2.xpose.msra.mxu0 0.0
  %1348 = vmatprep.subr.mxu0 0.0
  %1349 = vmatpush2.xpose.msra.mxu0 0.0
  %1350 = vmatprep.subr.mxu0 0.0
  %1351 = vmatpush2.xpose.msra.mxu0 0.0
  %1352 = vmatprep.subr.mxu0 0.0
  %1353 = vmatpush2.xpose.msra.mxu0 0.0
  %1354 = vmatprep.subr.mxu0 0.0
  %1355 = vmatpush2.xpose.msra.mxu0 0.0
  %1356 = vmatprep.subr.mxu0 0.0
  %1357 = vmatpush2.xpose.msra.mxu0 0.0
  %1358 = vmatprep.subr.mxu0 0.0
  %1359 = vmatpush2.xpose.msra.mxu0 0.0
  %1360 = vmatprep.mubr.f32.mxu0 0.0
  %1361 = vmatmul.mubr.f32.gmra.mxu0 %v1292
  %v1362 = vpop.f32.mrf.mxu0
  %v1363 = vadd.f32 0.0, %v1362
  %v1364 = vpop.f32.mrf.mxu0
  %1365 = vdwg.mxu0
  %v1366 = vmul.f32 %v1286, 0.25
  %v1367 = vmul.f32 %v1363, 0.25
  %v1368 = vadd.f32 %v1366, %v306
  %v1369 = vadd.f32 %v1367, %v310
  %v1370 = vsel %vm315, %v1368, -inf
  %1371 = vmax.xlane.f32.xlu0 %v1370
  %v1372 = vpop.xlane.xlu0 %1371
  %v1373 = vsel %vm315, %v1369, -inf
  %1374 = vmax.xlane.f32.xlu0 %v1373
  %v1375 = vpop.xlane.xlu0 %1374
  %v1376 = vsub.f32 %v1368, %v1372
  %v1377 = vsub.f32 %v1369, %v1375
  %v1378 = vmul.f32 %v1376, 1.442695
  %v1379 = vpow.pop %v1378
  %v1380 = vmul.f32 %v1377, 1.442695
  %v1381 = vpow.pop %v1380
  %v1382 = vsel %vm315, %v1379, 0.0
  %1383 = vadd.xlane.f32.xlu0 %v1382
  %v1384 = vpop.xlane.xlu0 %1383
  %v1385 = vsel %vm315, %v1381, 0.0
  %1386 = vadd.xlane.f32.xlu0 %v1385
  %v1387 = vpop.xlane.xlu0 %1386
  %v1388 = vrcp.pop %v1384
  %v1389 = vrcp.pop %v1387
  %v1390 = vmul.f32 %v1379, %v1388
  %v1391 = vmul.f32 %v1381, %v1389
  %1392 = vrot.lane.b32.xlu0 %v1206, 64
  %v1393 = vpop.permute.xlu0 %1392
  %v1396 = vsel %vm315, %v1390, 0
  %1398 = vmatprep.subr.mxu0 0.0
  %1399 = vmatpush1.msra.mxu0 0.0
  %1400 = vmatprep.subr.mxu0 0.0
  %1401 = vmatpush1.msra.mxu0 0.0
  %1402 = vmatprep.subr.mxu0 0.0
  %1403 = vmatpush1.msra.mxu0 0.0
  %1404 = vmatprep.subr.mxu0 0.0
  %1405 = vmatpush1.msra.mxu0 0.0
  %1406 = vmatprep.subr.mxu0 0.0
  %1407 = vmatpush1.msra.mxu0 0.0
  %1408 = vmatprep.subr.mxu0 0.0
  %1409 = vmatpush1.msra.mxu0 0.0
  %1410 = vmatprep.subr.mxu0 0.0
  %1411 = vmatpush1.msra.mxu0 0.0
  %1412 = vmatprep.subr.mxu0 0.0
  %1413 = vmatpush1.msra.mxu0 0.0
  %1414 = vmatprep.subr.mxu0 0.0
  %1415 = vmatpush1.msra.mxu0 0.0
  %1416 = vmatprep.subr.mxu0 0.0
  %1417 = vmatpush1.msra.mxu0 0.0
  %1418 = vmatprep.subr.mxu0 0.0
  %1419 = vmatpush1.msra.mxu0 0.0
  %1420 = vmatprep.subr.mxu0 0.0
  %1421 = vmatpush1.msra.mxu0 0.0
  %1422 = vmatprep.subr.mxu0 0.0
  %1423 = vmatpush1.msra.mxu0 0.0
  %1424 = vmatprep.subr.mxu0 0.0
  %1425 = vmatpush1.msra.mxu0 0.0
  %1426 = vmatprep.subr.mxu0 0.0
  %1427 = vmatpush1.msra.mxu0 0.0
  %1428 = vmatprep.subr.mxu0 0.0
  %1429 = vmatpush1.msra.mxu0 %v1393
  %1430 = vmatprep.subr.mxu0 0.0
  %1431 = vmatpush2.msra.mxu0 0.0
  %1432 = vmatprep.subr.mxu0 0.0
  %1433 = vmatpush2.msra.mxu0 0.0
  %1434 = vmatprep.subr.mxu0 0.0
  %1435 = vmatpush2.msra.mxu0 0.0
  %1436 = vmatprep.subr.mxu0 0.0
  %1437 = vmatpush2.msra.mxu0 0.0
  %1438 = vmatprep.subr.mxu0 0.0
  %1439 = vmatpush2.msra.mxu0 0.0
  %1440 = vmatprep.subr.mxu0 0.0
  %1441 = vmatpush2.msra.mxu0 0.0
  %1442 = vmatprep.subr.mxu0 0.0
  %1443 = vmatpush2.msra.mxu0 0.0
  %1444 = vmatprep.subr.mxu0 0.0
  %1445 = vmatpush2.msra.mxu0 0.0
  %1446 = vmatprep.subr.mxu0 0.0
  %1447 = vmatpush2.msra.mxu0 0.0
  %1448 = vmatprep.subr.mxu0 0.0
  %1449 = vmatpush2.msra.mxu0 0.0
  %1450 = vmatprep.subr.mxu0 0.0
  %1451 = vmatpush2.msra.mxu0 0.0
  %1452 = vmatprep.subr.mxu0 0.0
  %1453 = vmatpush2.msra.mxu0 0.0
  %1454 = vmatprep.subr.mxu0 0.0
  %1455 = vmatpush2.msra.mxu0 0.0
  %1456 = vmatprep.subr.mxu0 0.0
  %1457 = vmatpush2.msra.mxu0 0.0
  %1458 = vmatprep.subr.mxu0 0.0
  %1459 = vmatpush2.msra.mxu0 0.0
  %1460 = vmatprep.subr.mxu0 0.0
  %1461 = vmatpush2.msra.mxu0 0.0
  %1462 = vmatprep.mubr.f32.mxu0 0.0
  %1463 = vmatmul.mubr.f32.gmra.mxu0 %v1396
  %v1464 = vpop.f32.mrf.mxu0
  %v1465 = vadd.f32 0.0, %v1464
  %v1466 = vpop.f32.mrf.mxu0
  %1467 = vdwg.mxu0
  %1468 = vrot.lane.b32.xlu0 %v1209, 64
  %v1469 = vpop.permute.xlu0 %1468
  %v1472 = vsel %vm315, %v1391, 0
  %1474 = vmatprep.subr.mxu0 0.0
  %1475 = vmatpush1.msra.mxu0 0.0
  %1476 = vmatprep.subr.mxu0 0.0
  %1477 = vmatpush1.msra.mxu0 0.0
  %1478 = vmatprep.subr.mxu0 0.0
  %1479 = vmatpush1.msra.mxu0 0.0
  %1480 = vmatprep.subr.mxu0 0.0
  %1481 = vmatpush1.msra.mxu0 0.0
  %1482 = vmatprep.subr.mxu0 0.0
  %1483 = vmatpush1.msra.mxu0 0.0
  %1484 = vmatprep.subr.mxu0 0.0
  %1485 = vmatpush1.msra.mxu0 0.0
  %1486 = vmatprep.subr.mxu0 0.0
  %1487 = vmatpush1.msra.mxu0 0.0
  %1488 = vmatprep.subr.mxu0 0.0
  %1489 = vmatpush1.msra.mxu0 0.0
  %1490 = vmatprep.subr.mxu0 0.0
  %1491 = vmatpush1.msra.mxu0 0.0
  %1492 = vmatprep.subr.mxu0 0.0
  %1493 = vmatpush1.msra.mxu0 0.0
  %1494 = vmatprep.subr.mxu0 0.0
  %1495 = vmatpush1.msra.mxu0 0.0
  %1496 = vmatprep.subr.mxu0 0.0
  %1497 = vmatpush1.msra.mxu0 0.0
  %1498 = vmatprep.subr.mxu0 0.0
  %1499 = vmatpush1.msra.mxu0 0.0
  %1500 = vmatprep.subr.mxu0 0.0
  %1501 = vmatpush1.msra.mxu0 0.0
  %1502 = vmatprep.subr.mxu0 0.0
  %1503 = vmatpush1.msra.mxu0 0.0
  %1504 = vmatprep.subr.mxu0 0.0
  %1505 = vmatpush1.msra.mxu0 %v1469
  %1506 = vmatprep.subr.mxu0 0.0
  %1507 = vmatpush2.msra.mxu0 0.0
  %1508 = vmatprep.subr.mxu0 0.0
  %1509 = vmatpush2.msra.mxu0 0.0
  %1510 = vmatprep.subr.mxu0 0.0
  %1511 = vmatpush2.msra.mxu0 0.0
  %1512 = vmatprep.subr.mxu0 0.0
  %1513 = vmatpush2.msra.mxu0 0.0
  %1514 = vmatprep.subr.mxu0 0.0
  %1515 = vmatpush2.msra.mxu0 0.0
  %1516 = vmatprep.subr.mxu0 0.0
  %1517 = vmatpush2.msra.mxu0 0.0
  %1518 = vmatprep.subr.mxu0 0.0
  %1519 = vmatpush2.msra.mxu0 0.0
  %1520 = vmatprep.subr.mxu0 0.0
  %1521 = vmatpush2.msra.mxu0 0.0
  %1522 = vmatprep.subr.mxu0 0.0
  %1523 = vmatpush2.msra.mxu0 0.0
  %1524 = vmatprep.subr.mxu0 0.0
  %1525 = vmatpush2.msra.mxu0 0.0
  %1526 = vmatprep.subr.mxu0 0.0
  %1527 = vmatpush2.msra.mxu0 0.0
  %1528 = vmatprep.subr.mxu0 0.0
  %1529 = vmatpush2.msra.mxu0 0.0
  %1530 = vmatprep.subr.mxu0 0.0
  %1531 = vmatpush2.msra.mxu0 0.0
  %1532 = vmatprep.subr.mxu0 0.0
  %1533 = vmatpush2.msra.mxu0 0.0
  %1534 = vmatprep.subr.mxu0 0.0
  %1535 = vmatpush2.msra.mxu0 0.0
  %1536 = vmatprep.subr.mxu0 0.0
  %1537 = vmatpush2.msra.mxu0 0.0
  %1538 = vmatprep.mubr.f32.mxu0 0.0
  %1539 = vmatmul.mubr.f32.gmra.mxu0 %v1472
  %v1540 = vpop.f32.mrf.mxu0
  %v1541 = vadd.f32 0.0, %v1540
  %v1542 = vpop.f32.mrf.mxu0
  %1543 = vdwg.mxu0
  %1544 = vrot.lane.b32.xlu0 %v1206, 112
  %v1545 = vpop.permute.xlu0 %1544
  %1546 = vrot.lane.b32.xlu0 %v1206, 80
  %v1547 = vpop.permute.xlu0 %1546
  %v1548 = vsel %vm147, %v1545, 0
  %v1550 = vsel %vm147, %v1547, 0
  %1552 = vmatprep.subr.mxu0 0.0
  %1553 = vmatpush1.xpose.msra.mxu0 0.0
  %1554 = vmatprep.subr.mxu0 0.0
  %1555 = vmatpush1.xpose.msra.mxu0 0.0
  %1556 = vmatprep.subr.mxu0 0.0
  %1557 = vmatpush1.xpose.msra.mxu0 0.0
  %1558 = vmatprep.subr.mxu0 0.0
  %1559 = vmatpush1.xpose.msra.mxu0 0.0
  %1560 = vmatprep.subr.mxu0 0.0
  %1561 = vmatpush1.xpose.msra.mxu0 0.0
  %1562 = vmatprep.subr.mxu0 0.0
  %1563 = vmatpush1.xpose.msra.mxu0 0.0
  %1564 = vmatprep.subr.mxu0 0.0
  %1565 = vmatpush1.xpose.msra.mxu0 0.0
  %1566 = vmatprep.subr.mxu0 0.0
  %1567 = vmatpush1.xpose.msra.mxu0 0.0
  %1568 = vmatprep.subr.mxu0 0.0
  %1569 = vmatpush1.xpose.msra.mxu0 0.0
  %1570 = vmatprep.subr.mxu0 0.0
  %1571 = vmatpush1.xpose.msra.mxu0 0.0
  %1572 = vmatprep.subr.mxu0 0.0
  %1573 = vmatpush1.xpose.msra.mxu0 0.0
  %1574 = vmatprep.subr.mxu0 0.0
  %1575 = vmatpush1.xpose.msra.mxu0 0.0
  %1576 = vmatprep.subr.mxu0 0.0
  %1577 = vmatpush1.xpose.msra.mxu0 0.0
  %1578 = vmatprep.subr.mxu0 0.0
  %1579 = vmatpush1.xpose.msra.mxu0 0.0
  %1580 = vmatprep.subr.mxu0 0.0
  %1581 = vmatpush1.xpose.msra.mxu0 0.0
  %1582 = vmatprep.subr.mxu0 0.0
  %1583 = vmatpush1.xpose.msra.mxu0 %v1550
  %1584 = vmatprep.subr.mxu0 0.0
  %1585 = vmatpush2.xpose.msra.mxu0 0.0
  %1586 = vmatprep.subr.mxu0 0.0
  %1587 = vmatpush2.xpose.msra.mxu0 0.0
  %1588 = vmatprep.subr.mxu0 0.0
  %1589 = vmatpush2.xpose.msra.mxu0 0.0
  %1590 = vmatprep.subr.mxu0 0.0
  %1591 = vmatpush2.xpose.msra.mxu0 0.0
  %1592 = vmatprep.subr.mxu0 0.0
  %1593 = vmatpush2.xpose.msra.mxu0 0.0
  %1594 = vmatprep.subr.mxu0 0.0
  %1595 = vmatpush2.xpose.msra.mxu0 0.0
  %1596 = vmatprep.subr.mxu0 0.0
  %1597 = vmatpush2.xpose.msra.mxu0 0.0
  %1598 = vmatprep.subr.mxu0 0.0
  %1599 = vmatpush2.xpose.msra.mxu0 0.0
  %1600 = vmatprep.subr.mxu0 0.0
  %1601 = vmatpush2.xpose.msra.mxu0 0.0
  %1602 = vmatprep.subr.mxu0 0.0
  %1603 = vmatpush2.xpose.msra.mxu0 0.0
  %1604 = vmatprep.subr.mxu0 0.0
  %1605 = vmatpush2.xpose.msra.mxu0 0.0
  %1606 = vmatprep.subr.mxu0 0.0
  %1607 = vmatpush2.xpose.msra.mxu0 0.0
  %1608 = vmatprep.subr.mxu0 0.0
  %1609 = vmatpush2.xpose.msra.mxu0 0.0
  %1610 = vmatprep.subr.mxu0 0.0
  %1611 = vmatpush2.xpose.msra.mxu0 0.0
  %1612 = vmatprep.subr.mxu0 0.0
  %1613 = vmatpush2.xpose.msra.mxu0 0.0
  %1614 = vmatprep.subr.mxu0 0.0
  %1615 = vmatpush2.xpose.msra.mxu0 0.0
  %1616 = vmatprep.mubr.f32.mxu0 0.0
  %1617 = vmatmul.mubr.f32.gmra.mxu0 %v1548
  %v1618 = vpop.f32.mrf.mxu0
  %v1619 = vadd.f32 0.0, %v1618
  %v1620 = vpop.f32.mrf.mxu0
  %1621 = vdwg.mxu0
  %1622 = vrot.lane.b32.xlu0 %v1209, 112
  %v1623 = vpop.permute.xlu0 %1622
  %1624 = vrot.lane.b32.xlu0 %v1209, 80
  %v1625 = vpop.permute.xlu0 %1624
  %v1626 = vsel %vm147, %v1623, 0
  %v1628 = vsel %vm147, %v1625, 0
  %1630 = vmatprep.subr.mxu0 0.0
  %1631 = vmatpush1.xpose.msra.mxu0 0.0
  %1632 = vmatprep.subr.mxu0 0.0
  %1633 = vmatpush1.xpose.msra.mxu0 0.0
  %1634 = vmatprep.subr.mxu0 0.0
  %1635 = vmatpush1.xpose.msra.mxu0 0.0
  %1636 = vmatprep.subr.mxu0 0.0
  %1637 = vmatpush1.xpose.msra.mxu0 0.0
  %1638 = vmatprep.subr.mxu0 0.0
  %1639 = vmatpush1.xpose.msra.mxu0 0.0
  %1640 = vmatprep.subr.mxu0 0.0
  %1641 = vmatpush1.xpose.msra.mxu0 0.0
  %1642 = vmatprep.subr.mxu0 0.0
  %1643 = vmatpush1.xpose.msra.mxu0 0.0
  %1644 = vmatprep.subr.mxu0 0.0
  %1645 = vmatpush1.xpose.msra.mxu0 0.0
  %1646 = vmatprep.subr.mxu0 0.0
  %1647 = vmatpush1.xpose.msra.mxu0 0.0
  %1648 = vmatprep.subr.mxu0 0.0
  %1649 = vmatpush1.xpose.msra.mxu0 0.0
  %1650 = vmatprep.subr.mxu0 0.0
  %1651 = vmatpush1.xpose.msra.mxu0 0.0
  %1652 = vmatprep.subr.mxu0 0.0
  %1653 = vmatpush1.xpose.msra.mxu0 0.0
  %1654 = vmatprep.subr.mxu0 0.0
  %1655 = vmatpush1.xpose.msra.mxu0 0.0
  %1656 = vmatprep.subr.mxu0 0.0
  %1657 = vmatpush1.xpose.msra.mxu0 0.0
  %1658 = vmatprep.subr.mxu0 0.0
  %1659 = vmatpush1.xpose.msra.mxu0 0.0
  %1660 = vmatprep.subr.mxu0 0.0
  %1661 = vmatpush1.xpose.msra.mxu0 %v1628
  %1662 = vmatprep.subr.mxu0 0.0
  %1663 = vmatpush2.xpose.msra.mxu0 0.0
  %1664 = vmatprep.subr.mxu0 0.0
  %1665 = vmatpush2.xpose.msra.mxu0 0.0
  %1666 = vmatprep.subr.mxu0 0.0
  %1667 = vmatpush2.xpose.msra.mxu0 0.0
  %1668 = vmatprep.subr.mxu0 0.0
  %1669 = vmatpush2.xpose.msra.mxu0 0.0
  %1670 = vmatprep.subr.mxu0 0.0
  %1671 = vmatpush2.xpose.msra.mxu0 0.0
  %1672 = vmatprep.subr.mxu0 0.0
  %1673 = vmatpush2.xpose.msra.mxu0 0.0
  %1674 = vmatprep.subr.mxu0 0.0
  %1675 = vmatpush2.xpose.msra.mxu0 0.0
  %1676 = vmatprep.subr.mxu0 0.0
  %1677 = vmatpush2.xpose.msra.mxu0 0.0
  %1678 = vmatprep.subr.mxu0 0.0
  %1679 = vmatpush2.xpose.msra.mxu0 0.0
  %1680 = vmatprep.subr.mxu0 0.0
  %1681 = vmatpush2.xpose.msra.mxu0 0.0
  %1682 = vmatprep.subr.mxu0 0.0
  %1683 = vmatpush2.xpose.msra.mxu0 0.0
  %1684 = vmatprep.subr.mxu0 0.0
  %1685 = vmatpush2.xpose.msra.mxu0 0.0
  %1686 = vmatprep.subr.mxu0 0.0
  %1687 = vmatpush2.xpose.msra.mxu0 0.0
  %1688 = vmatprep.subr.mxu0 0.0
  %1689 = vmatpush2.xpose.msra.mxu0 0.0
  %1690 = vmatprep.subr.mxu0 0.0
  %1691 = vmatpush2.xpose.msra.mxu0 0.0
  %1692 = vmatprep.subr.mxu0 0.0
  %1693 = vmatpush2.xpose.msra.mxu0 0.0
  %1694 = vmatprep.mubr.f32.mxu0 0.0
  %1695 = vmatmul.mubr.f32.gmra.mxu0 %v1626
  %v1696 = vpop.f32.mrf.mxu0
  %v1697 = vadd.f32 0.0, %v1696
  %v1698 = vpop.f32.mrf.mxu0
  %1699 = vdwg.mxu0
  %v1700 = vmul.f32 %v1619, 0.25
  %v1701 = vmul.f32 %v1697, 0.25
  %v1702 = vadd.f32 %v1700, %v306
  %v1703 = vadd.f32 %v1701, %v310
  %v1704 = vsel %vm315, %v1702, -inf
  %1705 = vmax.xlane.f32.xlu0 %v1704
  %v1706 = vpop.xlane.xlu0 %1705
  %v1707 = vsel %vm315, %v1703, -inf
  %1708 = vmax.xlane.f32.xlu0 %v1707
  %v1709 = vpop.xlane.xlu0 %1708
  %v1710 = vsub.f32 %v1702, %v1706
  %v1711 = vsub.f32 %v1703, %v1709
  %v1712 = vmul.f32 %v1710, 1.442695
  %v1713 = vpow.pop %v1712
  %v1714 = vmul.f32 %v1711, 1.442695
  %v1715 = vpow.pop %v1714
  %v1716 = vsel %vm315, %v1713, 0.0
  %1717 = vadd.xlane.f32.xlu0 %v1716
  %v1718 = vpop.xlane.xlu0 %1717
  %v1719 = vsel %vm315, %v1715, 0.0
  %1720 = vadd.xlane.f32.xlu0 %v1719
  %v1721 = vpop.xlane.xlu0 %1720
  %v1722 = vrcp.pop %v1718
  %v1723 = vrcp.pop %v1721
  %v1724 = vmul.f32 %v1713, %v1722
  %v1725 = vmul.f32 %v1715, %v1723
  %1726 = vrot.lane.b32.xlu0 %v1206, 48
  %v1727 = vpop.permute.xlu0 %1726
  %v1730 = vsel %vm315, %v1724, 0
  %1732 = vmatprep.subr.mxu0 0.0
  %1733 = vmatpush1.msra.mxu0 0.0
  %1734 = vmatprep.subr.mxu0 0.0
  %1735 = vmatpush1.msra.mxu0 0.0
  %1736 = vmatprep.subr.mxu0 0.0
  %1737 = vmatpush1.msra.mxu0 0.0
  %1738 = vmatprep.subr.mxu0 0.0
  %1739 = vmatpush1.msra.mxu0 0.0
  %1740 = vmatprep.subr.mxu0 0.0
  %1741 = vmatpush1.msra.mxu0 0.0
  %1742 = vmatprep.subr.mxu0 0.0
  %1743 = vmatpush1.msra.mxu0 0.0
  %1744 = vmatprep.subr.mxu0 0.0
  %1745 = vmatpush1.msra.mxu0 0.0
  %1746 = vmatprep.subr.mxu0 0.0
  %1747 = vmatpush1.msra.mxu0 0.0
  %1748 = vmatprep.subr.mxu0 0.0
  %1749 = vmatpush1.msra.mxu0 0.0
  %1750 = vmatprep.subr.mxu0 0.0
  %1751 = vmatpush1.msra.mxu0 0.0
  %1752 = vmatprep.subr.mxu0 0.0
  %1753 = vmatpush1.msra.mxu0 0.0
  %1754 = vmatprep.subr.mxu0 0.0
  %1755 = vmatpush1.msra.mxu0 0.0
  %1756 = vmatprep.subr.mxu0 0.0
  %1757 = vmatpush1.msra.mxu0 0.0
  %1758 = vmatprep.subr.mxu0 0.0
  %1759 = vmatpush1.msra.mxu0 0.0
  %1760 = vmatprep.subr.mxu0 0.0
  %1761 = vmatpush1.msra.mxu0 0.0
  %1762 = vmatprep.subr.mxu0 0.0
  %1763 = vmatpush1.msra.mxu0 %v1727
  %1764 = vmatprep.subr.mxu0 0.0
  %1765 = vmatpush2.msra.mxu0 0.0
  %1766 = vmatprep.subr.mxu0 0.0
  %1767 = vmatpush2.msra.mxu0 0.0
  %1768 = vmatprep.subr.mxu0 0.0
  %1769 = vmatpush2.msra.mxu0 0.0
  %1770 = vmatprep.subr.mxu0 0.0
  %1771 = vmatpush2.msra.mxu0 0.0
  %1772 = vmatprep.subr.mxu0 0.0
  %1773 = vmatpush2.msra.mxu0 0.0
  %1774 = vmatprep.subr.mxu0 0.0
  %1775 = vmatpush2.msra.mxu0 0.0
  %1776 = vmatprep.subr.mxu0 0.0
  %1777 = vmatpush2.msra.mxu0 0.0
  %1778 = vmatprep.subr.mxu0 0.0
  %1779 = vmatpush2.msra.mxu0 0.0
  %1780 = vmatprep.subr.mxu0 0.0
  %1781 = vmatpush2.msra.mxu0 0.0
  %1782 = vmatprep.subr.mxu0 0.0
  %1783 = vmatpush2.msra.mxu0 0.0
  %1784 = vmatprep.subr.mxu0 0.0
  %1785 = vmatpush2.msra.mxu0 0.0
  %1786 = vmatprep.subr.mxu0 0.0
  %1787 = vmatpush2.msra.mxu0 0.0
  %1788 = vmatprep.subr.mxu0 0.0
  %1789 = vmatpush2.msra.mxu0 0.0
  %1790 = vmatprep.subr.mxu0 0.0
  %1791 = vmatpush2.msra.mxu0 0.0
  %1792 = vmatprep.subr.mxu0 0.0
  %1793 = vmatpush2.msra.mxu0 0.0
  %1794 = vmatprep.subr.mxu0 0.0
  %1795 = vmatpush2.msra.mxu0 0.0
  %1796 = vmatprep.mubr.f32.mxu0 0.0
  %1797 = vmatmul.mubr.f32.gmra.mxu0 %v1730
  %v1798 = vpop.f32.mrf.mxu0
  %v1799 = vadd.f32 0.0, %v1798
  %v1800 = vpop.f32.mrf.mxu0
  %1801 = vdwg.mxu0
  %1802 = vrot.lane.b32.xlu0 %v1209, 48
  %v1803 = vpop.permute.xlu0 %1802
  %v1806 = vsel %vm315, %v1725, 0
  %1808 = vmatprep.subr.mxu0 0.0
  %1809 = vmatpush1.msra.mxu0 0.0
  %1810 = vmatprep.subr.mxu0 0.0
  %1811 = vmatpush1.msra.mxu0 0.0
  %1812 = vmatprep.subr.mxu0 0.0
  %1813 = vmatpush1.msra.mxu0 0.0
  %1814 = vmatprep.subr.mxu0 0.0
  %1815 = vmatpush1.msra.mxu0 0.0
  %1816 = vmatprep.subr.mxu0 0.0
  %1817 = vmatpush1.msra.mxu0 0.0
  %1818 = vmatprep.subr.mxu0 0.0
  %1819 = vmatpush1.msra.mxu0 0.0
  %1820 = vmatprep.subr.mxu0 0.0
  %1821 = vmatpush1.msra.mxu0 0.0
  %1822 = vmatprep.subr.mxu0 0.0
  %1823 = vmatpush1.msra.mxu0 0.0
  %1824 = vmatprep.subr.mxu0 0.0
  %1825 = vmatpush1.msra.mxu0 0.0
  %1826 = vmatprep.subr.mxu0 0.0
  %1827 = vmatpush1.msra.mxu0 0.0
  %1828 = vmatprep.subr.mxu0 0.0
  %1829 = vmatpush1.msra.mxu0 0.0
  %1830 = vmatprep.subr.mxu0 0.0
  %1831 = vmatpush1.msra.mxu0 0.0
  %1832 = vmatprep.subr.mxu0 0.0
  %1833 = vmatpush1.msra.mxu0 0.0
  %1834 = vmatprep.subr.mxu0 0.0
  %1835 = vmatpush1.msra.mxu0 0.0
  %1836 = vmatprep.subr.mxu0 0.0
  %1837 = vmatpush1.msra.mxu0 0.0
  %1838 = vmatprep.subr.mxu0 0.0
  %1839 = vmatpush1.msra.mxu0 %v1803
  %1840 = vmatprep.subr.mxu0 0.0
  %1841 = vmatpush2.msra.mxu0 0.0
  %1842 = vmatprep.subr.mxu0 0.0
  %1843 = vmatpush2.msra.mxu0 0.0
  %1844 = vmatprep.subr.mxu0 0.0
  %1845 = vmatpush2.msra.mxu0 0.0
  %1846 = vmatprep.subr.mxu0 0.0
  %1847 = vmatpush2.msra.mxu0 0.0
  %1848 = vmatprep.subr.mxu0 0.0
  %1849 = vmatpush2.msra.mxu0 0.0
  %1850 = vmatprep.subr.mxu0 0.0
  %1851 = vmatpush2.msra.mxu0 0.0
  %1852 = vmatprep.subr.mxu0 0.0
  %1853 = vmatpush2.msra.mxu0 0.0
  %1854 = vmatprep.subr.mxu0 0.0
  %1855 = vmatpush2.msra.mxu0 0.0
  %1856 = vmatprep.subr.mxu0 0.0
  %1857 = vmatpush2.msra.mxu0 0.0
  %1858 = vmatprep.subr.mxu0 0.0
  %1859 = vmatpush2.msra.mxu0 0.0
  %1860 = vmatprep.subr.mxu0 0.0
  %1861 = vmatpush2.msra.mxu0 0.0
  %1862 = vmatprep.subr.mxu0 0.0
  %1863 = vmatpush2.msra.mxu0 0.0
  %1864 = vmatprep.subr.mxu0 0.0
  %1865 = vmatpush2.msra.mxu0 0.0
  %1866 = vmatprep.subr.mxu0 0.0
  %1867 = vmatpush2.msra.mxu0 0.0
  %1868 = vmatprep.subr.mxu0 0.0
  %1869 = vmatpush2.msra.mxu0 0.0
  %1870 = vmatprep.subr.mxu0 0.0
  %1871 = vmatpush2.msra.mxu0 0.0
  %1872 = vmatprep.mubr.f32.mxu0 0.0
  %1873 = vmatmul.mubr.f32.gmra.mxu0 %v1806
  %v1874 = vpop.f32.mrf.mxu0
  %v1875 = vadd.f32 0.0, %v1874
  %v1876 = vpop.f32.mrf.mxu0
  %1877 = vdwg.mxu0
  %1880 = vrot.lane.b32.xlu0 %v1799, 16
  %v1881 = vpop.permute.xlu0 %1880
  %1882 = vrot.lane.b32.xlu0 %v1875, 16
  %v1883 = vpop.permute.xlu0 %1882
  %v1886 = vsel %vm147, %v1465, %v1881
  %v1887 = vsel %vm147, %v1541, %v1883
  %v1888 = vpack.c.bf16 %v1887, %v1886
  %s1889 = scalar_lea.vmem %s5, 16
  %v1890 = vld [vmem:[%s1889] sm:$0xf]
  %v1891 = vld [vmem:[%s1889 + $0x4] sm:$0xf]
  %v1892 = vld [vmem:[%s1889 + $0x8] sm:$0xf]
  %v1893 = vld [vmem:[%s1889 + $0xc] sm:$0xf]
  %v1894 = vlaneseq
  %v1895 = vshrl.u32 %v1894, 7
  %v1896 = vsub.s32 1, %v1895
  %v1897 = vrot.slane %v1145, %v1896
  %v1902 = vunpack.c.l.b16 %v1890
  %v1903 = vunpack.c.l.b16 %v1891
  %v1904 = vunpack.c.l.b16 %v1892
  %v1905 = vunpack.c.l.b16 %v1893
  %v1906 = vpack.c.b16 %v1903, %v1902
  %v1907 = vpack.c.b16 %v1905, %v1904
  %v1911 = vsel %vm36, %v1888, 0
  %1913 = vmatprep.subr.bf16.mxu0 0
  %1914 = vmatpush1.bf16.msra.mxu0 0
  %1915 = vmatprep.subr.bf16.mxu0 0
  %1916 = vmatpush1.bf16.msra.mxu0 0
  %1917 = vmatprep.subr.bf16.mxu0 0
  %1918 = vmatpush1.bf16.msra.mxu0 0
  %1919 = vmatprep.subr.bf16.mxu0 0
  %1920 = vmatpush1.bf16.msra.mxu0 0
  %1921 = vmatprep.subr.bf16.mxu0 0
  %1922 = vmatpush1.bf16.msra.mxu0 0
  %1923 = vmatprep.subr.bf16.mxu0 0
  %1924 = vmatpush1.bf16.msra.mxu0 0
  %1925 = vmatprep.subr.bf16.mxu0 0
  %1926 = vmatpush1.bf16.msra.mxu0 %v1907
  %1927 = vmatprep.subr.bf16.mxu0 0
  %1928 = vmatpush1.bf16.msra.mxu0 %v1906
  %1929 = vmatprep.subr.bf16.mxu0 0
  %1930 = vmatpush2.bf16.msra.mxu0 0
  %1931 = vmatprep.subr.bf16.mxu0 0
  %1932 = vmatpush2.bf16.msra.mxu0 0
  %1933 = vmatprep.subr.bf16.mxu0 0
  %1934 = vmatpush2.bf16.msra.mxu0 0
  %1935 = vmatprep.subr.bf16.mxu0 0
  %1936 = vmatpush2.bf16.msra.mxu0 0
  %1937 = vmatprep.subr.bf16.mxu0 0
  %1938 = vmatpush2.bf16.msra.mxu0 0
  %1939 = vmatprep.subr.bf16.mxu0 0
  %1940 = vmatpush2.bf16.msra.mxu0 0
  %1941 = vmatprep.subr.bf16.mxu0 0
  %1942 = vmatpush2.bf16.msra.mxu0 0
  %1943 = vmatprep.subr.bf16.mxu0 0
  %1944 = vmatpush2.bf16.msra.mxu0 0
  %1945 = vmatprep.mubr.bf16.mxu0 0
  %1946 = vmatmul.mubr.bf16.gmra.mxu0 %v1911
  %v1947 = vpop.f32.mrf.mxu0
  %v1948 = vadd.f32 %v1897, %v1947
  %v1949 = vpop.f32.mrf.mxu0
  %v1950 = vpop.f32.mrf.mxu0
  %v1951 = vadd.f32 %v1897, %v1950
  %v1952 = vpop.f32.mrf.mxu0
  %1953 = vdwg.mxu0
  %v1954 = vadd.f32 %v1948, %v1142
  %v1955 = vadd.f32 %v1951, %v1143
  %v1956 = vsel %vm36, %v1954, 0.0
  %1957 = vadd.xlane.f32.xlu0 %v1956
  %v1958 = vpop.xlane.xlu0 %1957
  %v1959 = vsel %vm36, %v1955, 0.0
  %1960 = vadd.xlane.f32.xlu0 %v1959
  %v1961 = vpop.xlane.xlu0 %1960
  %v1962 = vmul.f32 %v1958, %v43
  %v1963 = vmul.f32 %v1961, %v43
  %v1964 = vsub.f32 %v1954, %v1962
  %v1965 = vsub.f32 %v1955, %v1963
  %v1966 = vmul.f32 %v1964, %v1964
  %v1967 = vmul.f32 %v1965, %v1965
  %v1968 = vsel %vm36, %v1966, 0.0
  %1969 = vadd.xlane.f32.xlu0 %v1968
  %v1970 = vpop.xlane.xlu0 %1969
  %v1971 = vsel %vm36, %v1967, 0.0
  %1972 = vadd.xlane.f32.xlu0 %v1971
  %v1973 = vpop.xlane.xlu0 %1972
  %v1974 = vmul.f32 %v1970, %v43
  %v1975 = vmul.f32 %v1973, %v43
  %v1976 = vadd.f32 %v1974, 1e-06
  %v1977 = vadd.f32 %v1975, 1e-06
  %v1978 = vrsqrt.pop %v1976
  %v1979 = vrsqrt.pop %v1977
  %v1980 = vmul.f32 %v1964, %v1978
  %v1981 = vmul.f32 %v1965, %v1979
  %v1982 = vlaneseq
  %v1983 = vshrl.u32 %v1982, 7
  %v1984 = vsub.s32 2, %v1983
  %v1985 = vrot.slane %v1145, %v1984
  %v1986 = vmul.f32 %v1980, %v1985
  %v1987 = vmul.f32 %v1981, %v1985
  %v1988 = vlaneseq
  %v1989 = vshrl.u32 %v1988, 7
  %v1990 = vsub.s32 3, %v1989
  %v1991 = vrot.slane %v1145, %v1990
  %v1992 = vadd.f32 %v1986, %v1991
  %v1993 = vadd.f32 %v1987, %v1991
  %v1994 = vpack.c.bf16 %v1993, %v1992
  %s1995 = scalar_lea.vmem %s6, 16
  %v1996 = vld [vmem:[%s1995] sm:$0xf]
  %v1997 = vld [vmem:[%s1995 + $0x4] sm:$0xf]
  %v1998 = vld [vmem:[%s1995 + $0x8] sm:$0xf]
  %v1999 = vld [vmem:[%s1995 + $0xc] sm:$0xf]
  %v2000 = vlaneseq
  %v2001 = vshrl.u32 %v2000, 7
  %v2002 = vsub.s32 4, %v2001
  %v2003 = vrot.slane %v1145, %v2002
  %v2008 = vunpack.c.l.b16 %v1996
  %v2009 = vunpack.c.l.b16 %v1997
  %v2010 = vunpack.c.l.b16 %v1998
  %v2011 = vunpack.c.l.b16 %v1999
  %v2012 = vpack.c.b16 %v2009, %v2008
  %v2013 = vpack.c.b16 %v2011, %v2010
  %v2017 = vsel %vm36, %v1994, 0
  %2019 = vmatprep.subr.bf16.mxu0 0
  %2020 = vmatpush1.bf16.msra.mxu0 0
  %2021 = vmatprep.subr.bf16.mxu0 0
  %2022 = vmatpush1.bf16.msra.mxu0 0
  %2023 = vmatprep.subr.bf16.mxu0 0
  %2024 = vmatpush1.bf16.msra.mxu0 0
  %2025 = vmatprep.subr.bf16.mxu0 0
  %2026 = vmatpush1.bf16.msra.mxu0 0
  %2027 = vmatprep.subr.bf16.mxu0 0
  %2028 = vmatpush1.bf16.msra.mxu0 0
  %2029 = vmatprep.subr.bf16.mxu0 0
  %2030 = vmatpush1.bf16.msra.mxu0 0
  %2031 = vmatprep.subr.bf16.mxu0 0
  %2032 = vmatpush1.bf16.msra.mxu0 %v2013
  %2033 = vmatprep.subr.bf16.mxu0 0
  %2034 = vmatpush1.bf16.msra.mxu0 %v2012
  %2035 = vmatprep.subr.bf16.mxu0 0
  %2036 = vmatpush2.bf16.msra.mxu0 0
  %2037 = vmatprep.subr.bf16.mxu0 0
  %2038 = vmatpush2.bf16.msra.mxu0 0
  %2039 = vmatprep.subr.bf16.mxu0 0
  %2040 = vmatpush2.bf16.msra.mxu0 0
  %2041 = vmatprep.subr.bf16.mxu0 0
  %2042 = vmatpush2.bf16.msra.mxu0 0
  %2043 = vmatprep.subr.bf16.mxu0 0
  %2044 = vmatpush2.bf16.msra.mxu0 0
  %2045 = vmatprep.subr.bf16.mxu0 0
  %2046 = vmatpush2.bf16.msra.mxu0 0
  %2047 = vmatprep.subr.bf16.mxu0 0
  %2048 = vmatpush2.bf16.msra.mxu0 0
  %2049 = vmatprep.subr.bf16.mxu0 0
  %2050 = vmatpush2.bf16.msra.mxu0 0
  %2051 = vmatprep.mubr.bf16.mxu0 0
  %2052 = vmatmul.mubr.bf16.gmra.mxu0 %v2017
  %v2053 = vpop.f32.mrf.mxu0
  %v2054 = vadd.f32 %v2003, %v2053
  %v2055 = vpop.f32.mrf.mxu0
  %v2056 = vpop.f32.mrf.mxu0
  %v2057 = vadd.f32 %v2003, %v2056
  %v2058 = vpop.f32.mrf.mxu0
  %2059 = vdwg.mxu0
  %v2060 = vmul.f32 %v2054, 0.5
  %v2061 = vmul.f32 %v2057, 0.5
  %v2062 = vmul.f32 %v2054, 0.044715
  %v2063 = vmul.f32 %v2057, 0.044715
  %v2064 = vmul.f32 %v2062, %v2054
  %v2065 = vmul.f32 %v2063, %v2057
  %v2066 = vmul.f32 %v2064, %v2054
  %v2067 = vmul.f32 %v2065, %v2057
  %v2068 = vadd.f32 %v2054, %v2066
  %v2069 = vadd.f32 %v2057, %v2067
  %v2070 = vmul.f32 %v2068, 0.7978846
  %v2071 = vmul.f32 %v2069, 0.7978846
  %v2072 = vtanh.pop %v2070
  %v2073 = vtanh.pop %v2071
  %v2074 = vadd.f32 %v2072, 1.0
  %v2075 = vadd.f32 %v2073, 1.0
  %v2076 = vmul.f32 %v2060, %v2074
  %v2077 = vmul.f32 %v2061, %v2075
  %v2078 = vpack.c.bf16 %v2077, %v2076
  %s2079 = scalar_lea.vmem %s7, 32
  %v2080 = vld [vmem:[%s2079] sm:$0xf]
  %v2081 = vld [vmem:[%s2079 + $0x4] sm:$0xf]
  %v2082 = vld [vmem:[%s2079 + $0x8] sm:$0xf]
  %v2083 = vld [vmem:[%s2079 + $0xc] sm:$0xf]
  %v2084 = vld [vmem:[%s2079 + $0x10] sm:$0xf]
  %v2085 = vld [vmem:[%s2079 + $0x14] sm:$0xf]
  %v2086 = vld [vmem:[%s2079 + $0x18] sm:$0xf]
  %v2087 = vld [vmem:[%s2079 + $0x1c] sm:$0xf]
  %v2088 = vlaneseq
  %v2089 = vshrl.u32 %v2088, 7
  %v2090 = vsub.s32 5, %v2089
  %v2091 = vrot.slane %v1145, %v2090
  %v2100 = vunpack.c.l.b16 %v2080
  %v2101 = vunpack.c.l.b16 %v2081
  %v2102 = vunpack.c.l.b16 %v2082
  %v2103 = vunpack.c.l.b16 %v2083
  %v2104 = vunpack.c.l.b16 %v2084
  %v2105 = vunpack.c.l.b16 %v2085
  %v2106 = vunpack.c.l.b16 %v2086
  %v2107 = vunpack.c.l.b16 %v2087
  %v2108 = vpack.c.b16 %v2101, %v2100
  %v2109 = vpack.c.b16 %v2103, %v2102
  %v2110 = vpack.c.b16 %v2105, %v2104
  %v2111 = vpack.c.b16 %v2107, %v2106
  %v2117 = vsel %vm1059, %v2078, 0
  %2119 = vmatprep.subr.bf16.mxu0 0
  %2120 = vmatpush1.bf16.msra.mxu0 0
  %2121 = vmatprep.subr.bf16.mxu0 0
  %2122 = vmatpush1.bf16.msra.mxu0 0
  %2123 = vmatprep.subr.bf16.mxu0 0
  %2124 = vmatpush1.bf16.msra.mxu0 0
  %2125 = vmatprep.subr.bf16.mxu0 0
  %2126 = vmatpush1.bf16.msra.mxu0 0
  %2127 = vmatprep.subr.bf16.mxu0 0
  %2128 = vmatpush1.bf16.msra.mxu0 %v2111
  %2129 = vmatprep.subr.bf16.mxu0 0
  %2130 = vmatpush1.bf16.msra.mxu0 %v2110
  %2131 = vmatprep.subr.bf16.mxu0 0
  %2132 = vmatpush1.bf16.msra.mxu0 %v2109
  %2133 = vmatprep.subr.bf16.mxu0 0
  %2134 = vmatpush1.bf16.msra.mxu0 %v2108
  %2135 = vmatprep.subr.bf16.mxu0 0
  %2136 = vmatpush2.bf16.msra.mxu0 0
  %2137 = vmatprep.subr.bf16.mxu0 0
  %2138 = vmatpush2.bf16.msra.mxu0 0
  %2139 = vmatprep.subr.bf16.mxu0 0
  %2140 = vmatpush2.bf16.msra.mxu0 0
  %2141 = vmatprep.subr.bf16.mxu0 0
  %2142 = vmatpush2.bf16.msra.mxu0 0
  %2143 = vmatprep.subr.bf16.mxu0 0
  %2144 = vmatpush2.bf16.msra.mxu0 0
  %2145 = vmatprep.subr.bf16.mxu0 0
  %2146 = vmatpush2.bf16.msra.mxu0 0
  %2147 = vmatprep.subr.bf16.mxu0 0
  %2148 = vmatpush2.bf16.msra.mxu0 0
  %2149 = vmatprep.subr.bf16.mxu0 0
  %2150 = vmatpush2.bf16.msra.mxu0 0
  %2151 = vmatprep.mubr.bf16.mxu0 0
  %2152 = vmatmul.mubr.bf16.gmra.mxu0 %v2117
  %v2153 = vpop.f32.mrf.mxu0
  %v2154 = vadd.f32 %v2091, %v2153
  %v2155 = vpop.f32.mrf.mxu0
  %v2156 = vpop.f32.mrf.mxu0
  %v2157 = vadd.f32 %v2091, %v2156
  %v2158 = vpop.f32.mrf.mxu0
  %2159 = vdwg.mxu0
  %v2160 = vadd.f32 %v2154, %v1992
  %v2161 = vadd.f32 %v2157, %v1993
  %v2162 = vsel %vm36, %v2160, 0.0
  %2163 = vadd.xlane.f32.xlu0 %v2162
  %v2164 = vpop.xlane.xlu0 %2163
  %v2165 = vsel %vm36, %v2161, 0.0
  %2166 = vadd.xlane.f32.xlu0 %v2165
  %v2167 = vpop.xlane.xlu0 %2166
  %v2168 = vmul.f32 %v2164, %v43
  %v2169 = vmul.f32 %v2167, %v43
  %v2170 = vsub.f32 %v2160, %v2168
  %v2171 = vsub.f32 %v2161, %v2169
  %v2172 = vmul.f32 %v2170, %v2170
  %v2173 = vmul.f32 %v2171, %v2171
  %v2174 = vsel %vm36, %v2172, 0.0
  %2175 = vadd.xlane.f32.xlu0 %v2174
  %v2176 = vpop.xlane.xlu0 %2175
  %v2177 = vsel %vm36, %v2173, 0.0
  %2178 = vadd.xlane.f32.xlu0 %v2177
  %v2179 = vpop.xlane.xlu0 %2178
  %v2180 = vmul.f32 %v2176, %v43
  %v2181 = vmul.f32 %v2179, %v43
  %v2182 = vadd.f32 %v2180, 1e-06
  %v2183 = vadd.f32 %v2181, 1e-06
  %v2184 = vrsqrt.pop %v2182
  %v2185 = vrsqrt.pop %v2183
  %v2186 = vmul.f32 %v2170, %v2184
  %v2187 = vmul.f32 %v2171, %v2185
  %v2188 = vlaneseq
  %v2189 = vshrl.u32 %v2188, 7
  %v2190 = vsub.s32 6, %v2189
  %v2191 = vrot.slane %v1145, %v2190
  %v2192 = vmul.f32 %v2186, %v2191
  %v2193 = vmul.f32 %v2187, %v2191
  %v2194 = vlaneseq
  %v2195 = vshrl.u32 %v2194, 7
  %v2196 = vsub.s32 7, %v2195
  %v2197 = vrot.slane %v1145, %v2196
  %v2198 = vadd.f32 %v2192, %v2197
  %v2199 = vadd.f32 %v2193, %v2197
  %v2200 = vld [vmem:[%s3] sm:$0xf]
  %v2201 = vld [vmem:[%s3 + $0x4] sm:$0xf]
  %v2202 = vld [vmem:[%s3 + $0x8] sm:$0xf]
  %v2203 = vld [vmem:[%s3 + $0xc] sm:$0xf]
  %s2204 = scalar_lea.vmem %s3, 16
  %v2205 = vld [vmem:[%s2204] sm:$0xf]
  %v2206 = vld [vmem:[%s2204 + $0x4] sm:$0xf]
  %v2207 = vld [vmem:[%s2204 + $0x8] sm:$0xf]
  %v2208 = vld [vmem:[%s2204 + $0xc] sm:$0xf]
  %v2209 = vpack.c.bf16 %v2199, %v2198
  %v2210 = vlaneseq
  %v2211 = vshrl.u32 %v2210, 7
  %v2212 = vsub.s32 2, %v2211
  %v2213 = vrot.slane %v33, %v2212
  %v2218 = vunpack.c.l.b16 %v2200
  %v2219 = vunpack.c.l.b16 %v2201
  %v2220 = vunpack.c.l.b16 %v2202
  %v2221 = vunpack.c.l.b16 %v2203
  %v2222 = vpack.c.b16 %v2219, %v2218
  %v2223 = vpack.c.b16 %v2221, %v2220
  %v2227 = vsel %vm36, %v2209, 0
  %2229 = vmatprep.subr.bf16.mxu0 0
  %2230 = vmatpush1.bf16.msra.mxu0 0
  %2231 = vmatprep.subr.bf16.mxu0 0
  %2232 = vmatpush1.bf16.msra.mxu0 0
  %2233 = vmatprep.subr.bf16.mxu0 0
  %2234 = vmatpush1.bf16.msra.mxu0 0
  %2235 = vmatprep.subr.bf16.mxu0 0
  %2236 = vmatpush1.bf16.msra.mxu0 0
  %2237 = vmatprep.subr.bf16.mxu0 0
  %2238 = vmatpush1.bf16.msra.mxu0 0
  %2239 = vmatprep.subr.bf16.mxu0 0
  %2240 = vmatpush1.bf16.msra.mxu0 0
  %2241 = vmatprep.subr.bf16.mxu0 0
  %2242 = vmatpush1.bf16.msra.mxu0 %v2223
  %2243 = vmatprep.subr.bf16.mxu0 0
  %2244 = vmatpush1.bf16.msra.mxu0 %v2222
  %2245 = vmatprep.subr.bf16.mxu0 0
  %2246 = vmatpush2.bf16.msra.mxu0 0
  %2247 = vmatprep.subr.bf16.mxu0 0
  %2248 = vmatpush2.bf16.msra.mxu0 0
  %2249 = vmatprep.subr.bf16.mxu0 0
  %2250 = vmatpush2.bf16.msra.mxu0 0
  %2251 = vmatprep.subr.bf16.mxu0 0
  %2252 = vmatpush2.bf16.msra.mxu0 0
  %2253 = vmatprep.subr.bf16.mxu0 0
  %2254 = vmatpush2.bf16.msra.mxu0 0
  %2255 = vmatprep.subr.bf16.mxu0 0
  %2256 = vmatpush2.bf16.msra.mxu0 0
  %2257 = vmatprep.subr.bf16.mxu0 0
  %2258 = vmatpush2.bf16.msra.mxu0 0
  %2259 = vmatprep.subr.bf16.mxu0 0
  %2260 = vmatpush2.bf16.msra.mxu0 0
  %2261 = vmatprep.mubr.bf16.mxu0 0
  %2262 = vmatmul.mubr.bf16.gmra.mxu0 %v2227
  %v2263 = vpop.f32.mrf.mxu0
  %v2264 = vadd.f32 %v2213, %v2263
  %v2265 = vpop.f32.mrf.mxu0
  %v2266 = vpop.f32.mrf.mxu0
  %v2267 = vadd.f32 %v2213, %v2266
  %v2268 = vpop.f32.mrf.mxu0
  %2269 = vdwg.mxu0
  %v2270 = vmul.f32 %v2264, 0.5
  %v2271 = vmul.f32 %v2267, 0.5
  %v2272 = vmul.f32 %v2264, 0.044715
  %v2273 = vmul.f32 %v2267, 0.044715
  %v2274 = vmul.f32 %v2272, %v2264
  %v2275 = vmul.f32 %v2273, %v2267
  %v2276 = vmul.f32 %v2274, %v2264
  %v2277 = vmul.f32 %v2275, %v2267
  %v2278 = vadd.f32 %v2264, %v2276
  %v2279 = vadd.f32 %v2267, %v2277
  %v2280 = vmul.f32 %v2278, 0.7978846
  %v2281 = vmul.f32 %v2279, 0.7978846
  %v2282 = vtanh.pop %v2280
  %v2283 = vtanh.pop %v2281
  %v2284 = vadd.f32 %v2282, 1.0
  %v2285 = vadd.f32 %v2283, 1.0
  %v2286 = vmul.f32 %v2270, %v2284
  %v2287 = vmul.f32 %v2271, %v2285
  %v2288 = vsel %vm36, %v2286, 0.0
  %2289 = vadd.xlane.f32.xlu0 %v2288
  %v2290 = vpop.xlane.xlu0 %2289
  %v2291 = vsel %vm36, %v2287, 0.0
  %2292 = vadd.xlane.f32.xlu0 %v2291
  %v2293 = vpop.xlane.xlu0 %2292
  %v2294 = vmul.f32 %v2290, %v43
  %v2295 = vmul.f32 %v2293, %v43
  %v2296 = vsub.f32 %v2286, %v2294
  %v2297 = vsub.f32 %v2287, %v2295
  %v2298 = vmul.f32 %v2296, %v2296
  %v2299 = vmul.f32 %v2297, %v2297
  %v2300 = vsel %vm36, %v2298, 0.0
  %2301 = vadd.xlane.f32.xlu0 %v2300
  %v2302 = vpop.xlane.xlu0 %2301
  %v2303 = vsel %vm36, %v2299, 0.0
  %2304 = vadd.xlane.f32.xlu0 %v2303
  %v2305 = vpop.xlane.xlu0 %2304
  %v2306 = vmul.f32 %v2302, %v43
  %v2307 = vmul.f32 %v2305, %v43
  %v2308 = vadd.f32 %v2306, 1e-06
  %v2309 = vadd.f32 %v2307, 1e-06
  %v2310 = vrsqrt.pop %v2308
  %v2311 = vrsqrt.pop %v2309
  %v2312 = vmul.f32 %v2296, %v2310
  %v2313 = vmul.f32 %v2297, %v2311
  %v2314 = vlaneseq
  %v2315 = vshrl.u32 %v2314, 7
  %v2316 = vsub.s32 3, %v2315
  %v2317 = vrot.slane %v33, %v2316
  %v2318 = vmul.f32 %v2312, %v2317
  %v2319 = vmul.f32 %v2313, %v2317
  %v2320 = vlaneseq
  %v2321 = vshrl.u32 %v2320, 7
  %v2322 = vsub.s32 4, %v2321
  %v2323 = vrot.slane %v33, %v2322
  %v2324 = vadd.f32 %v2318, %v2323
  %v2325 = vadd.f32 %v2319, %v2323
  %v2326 = vpack.c.bf16 %v2325, %v2324
  %v2327 = vlaneseq
  %v2328 = vshrl.u32 %v2327, 7
  %v2329 = vsub.s32 5, %v2328
  %v2330 = vrot.slane %v33, %v2329
  %v2335 = vunpack.c.l.b16 %v2205
  %v2336 = vunpack.c.l.b16 %v2206
  %v2337 = vunpack.c.l.b16 %v2207
  %v2338 = vunpack.c.l.b16 %v2208
  %v2339 = vpack.c.b16 %v2336, %v2335
  %v2340 = vpack.c.b16 %v2338, %v2337
  %v2344 = vsel %vm36, %v2326, 0
  %2346 = vmatprep.subr.bf16.mxu0 0
  %2347 = vmatpush1.bf16.msra.mxu0 0
  %2348 = vmatprep.subr.bf16.mxu0 0
  %2349 = vmatpush1.bf16.msra.mxu0 0
  %2350 = vmatprep.subr.bf16.mxu0 0
  %2351 = vmatpush1.bf16.msra.mxu0 0
  %2352 = vmatprep.subr.bf16.mxu0 0
  %2353 = vmatpush1.bf16.msra.mxu0 0
  %2354 = vmatprep.subr.bf16.mxu0 0
  %2355 = vmatpush1.bf16.msra.mxu0 0
  %2356 = vmatprep.subr.bf16.mxu0 0
  %2357 = vmatpush1.bf16.msra.mxu0 0
  %2358 = vmatprep.subr.bf16.mxu0 0
  %2359 = vmatpush1.bf16.msra.mxu0 %v2340
  %2360 = vmatprep.subr.bf16.mxu0 0
  %2361 = vmatpush1.bf16.msra.mxu0 %v2339
  %2362 = vmatprep.subr.bf16.mxu0 0
  %2363 = vmatpush2.bf16.msra.mxu0 0
  %2364 = vmatprep.subr.bf16.mxu0 0
  %2365 = vmatpush2.bf16.msra.mxu0 0
  %2366 = vmatprep.subr.bf16.mxu0 0
  %2367 = vmatpush2.bf16.msra.mxu0 0
  %2368 = vmatprep.subr.bf16.mxu0 0
  %2369 = vmatpush2.bf16.msra.mxu0 0
  %2370 = vmatprep.subr.bf16.mxu0 0
  %2371 = vmatpush2.bf16.msra.mxu0 0
  %2372 = vmatprep.subr.bf16.mxu0 0
  %2373 = vmatpush2.bf16.msra.mxu0 0
  %2374 = vmatprep.subr.bf16.mxu0 0
  %2375 = vmatpush2.bf16.msra.mxu0 0
  %2376 = vmatprep.subr.bf16.mxu0 0
  %2377 = vmatpush2.bf16.msra.mxu0 0
  %2378 = vmatprep.mubr.bf16.mxu0 0
  %2379 = vmatmul.mubr.bf16.gmra.mxu0 %v2344
  %v2380 = vpop.f32.mrf.mxu0
  %v2381 = vadd.f32 %v2330, %v2380
  %v2382 = vpop.f32.mrf.mxu0
  %v2383 = vpop.f32.mrf.mxu0
  %v2384 = vadd.f32 %v2330, %v2383
  %v2385 = vpop.f32.mrf.mxu0
  %2386 = vdwg.mxu0
  %2387 = vmax.xlane.f32.xlu0 %v2381
  %v2388 = vpop.xlane.xlu0 %2387
  %2389 = vmax.xlane.f32.xlu0 %v2384
  %v2390 = vpop.xlane.xlu0 %2389
  %v2391 = vsub.f32 %v2381, %v2388
  %v2392 = vsub.f32 %v2384, %v2390
  %v2393 = vmul.f32 %v2391, 1.442695
  %v2394 = vpow.pop %v2393
  %v2395 = vmul.f32 %v2392, 1.442695
  %v2396 = vpow.pop %v2395
  %2397 = vadd.xlane.f32.xlu0 %v2394
  %v2398 = vpop.xlane.xlu0 %2397
  %2399 = vadd.xlane.f32.xlu0 %v2396
  %v2400 = vpop.xlane.xlu0 %2399
  %v2401 = vrcp.pop %v2398
  %v2402 = vmul.f32 %v2394, %v2401
  %v2403 = vrcp.pop %v2400
  %v2404 = vmul.f32 %v2396, %v2403
  %2405 = vst [vmem:[%s9] sm:$0xff] %v2402
  %2406 = vst [vmem:[%s9 + $0x8] sm:$0xff] %v2404
  // Predicated region
  $region38: #{cloze_forward.1} parent=0 // pred_check
    _
  $region39: #{cloze_forward.1} parent=0 // pred_check_branch
    %2408 = sbr.rel (0) target = $region41
  $region40: #{cloze_forward.1} parent=0 // pred_region
    _
  $region41: #{cloze_forward.1} parent=0 // pred_fallthru
    _
  // Predicated region
  $region42: #{cloze_forward.1} parent=0 // pred_check
    _
  $region43: #{cloze_forward.1} parent=0 // pred_check_branch
    %2410 = sbr.rel (0) target = $region45
  $region44: #{cloze_forward.1} parent=0 // pred_region
    _
  $region45: #{cloze_forward.1} parent=0 // pred_fallthru
    _

</llo_original>
